<compile_context>
chip_gen: v7x
topology: tpu7x:2x2x1
jax: 0.10.0
libtpu: 0.0.40
codegen_flags: <defaults>
</compile_context>

<pallas_src>
import functools

import jax
import jax.numpy as jnp
from jax import lax
from jax.experimental import pallas as pl
from jax.experimental.pallas import tpu as pltpu


_N_SUMS = 9   # kp3d_sq, mpjpe_sqrt, pose_l1, betas_l1, trans_l1, sm_kp, sm_pose, sm_betas, sm_trans


# ------------------------------ Pallas kernel -------------------------------

def _rot_elems(rx, ry, rz):
    """Rodrigues rotation-matrix entries for axis-angle rows of shape (1, M).

    Matches SMPL batch_rodrigues semantics (angle = ||r + 1e-8||).  Uses one
    rsqrt (EUP) instead of sqrt + 3 divides.  Returns the 9 matrix entries.
    """
    rx = rx + jnp.float32(1e-8)
    ry = ry + jnp.float32(1e-8)
    rz = rz + jnp.float32(1e-8)
    sq = rx * rx + ry * ry + rz * rz
    inv = lax.rsqrt(sq)
    angle = sq * inv                      # == sqrt(sq)
    ux, uy, uz = rx * inv, ry * inv, rz * inv
    c = jnp.cos(angle)
    s = jnp.sin(angle)
    t = 1.0 - c
    return (c + ux * ux * t, ux * uy * t - uz * s, ux * uz * t + uy * s,
            uy * ux * t + uz * s, c + uy * uy * t, uy * uz * t - ux * s,
            uz * ux * t - uy * s, uz * uy * t + ux * s, c + uz * uz * t)


def _fused_loss_kernel(kp_ref, pose_ref, feat_ref, gt_ref, o_ref, *, B, T, N):
    """All 9 partial sums of the HPSPI loss in one pass.

    kp_ref   : (8, M1)  pred xyz on sublanes 0..2, gt xyz on sublanes 4..6.
    pose_ref : (8, M2)  pred axis-angle on 0..2, gt axis-angle on 4..6.
    feat_ref : (Rpad, 128+ck) per-frame [theta(85)|0|kp3d flat|0], rows b*T+t.
    gt_ref   : (Rpad, 128)    per-frame [gt_trans(3)|0|gt_betas|0].
    o_ref    : SMEM f32[9] packed partial sums.
    """
    f32 = jnp.float32

    # ---- 3-D keypoints: MSE squared-sum and MPJPE sqrt-sum -----------------
    # Padded lanes are zero in both pred and gt rows -> contribute exactly 0.
    kp = kp_ref[...]
    dx = kp[0:1, :] - kp[4:5, :]
    dy = kp[1:2, :] - kp[5:6, :]
    dz = kp[2:3, :] - kp[6:7, :]
    per_pt = dx * dx + dy * dy + dz * dz            # (1, M1): VPU only
    o_ref[0] = jnp.sum(per_pt)                      # -> / (N*J*3)
    o_ref[1] = jnp.sum(jnp.sqrt(per_pt))            # -> / (N*J)

    # ---- SMPL pose: L1 between Rodrigues rotation matrices -----------------
    # Padded lanes are identical zeros in pred and gt -> exact 0 contribution.
    po = pose_ref[...]
    rp = _rot_elems(po[0:1, :], po[1:2, :], po[2:3, :])
    rg = _rot_elems(po[4:5, :], po[5:6, :], po[6:7, :])
    acc = jnp.abs(rp[0] - rg[0])
    for a, b in zip(rp[1:], rg[1:]):
        acc = acc + jnp.abs(a - b)                  # 8 VPU adds, ONE lane reduce
    o_ref[2] = jnp.sum(acc)                         # -> / (N*24*9)

    # ---- theta vs gt: shape (betas) and trans L1, sublane-first ------------
    feat = feat_ref[...]                            # (Rpad, C)
    rows_pad, C = feat.shape
    dbt = jnp.abs(feat[:, 0:128] - gt_ref[...])     # lane-aligned slice
    col_bt = jnp.sum(dbt, axis=0, keepdims=True)    # sublane reduce -> (1, 128)
    lane_bt = lax.broadcasted_iota(jnp.int32, (1, 128), 1)
    o_ref[3] = jnp.sum(col_bt * (lane_bt >= 75).astype(f32))   # betas
    o_ref[4] = jnp.sum(col_bt * (lane_bt < 3).astype(f32))     # trans

    # ---- temporal smoothness: in-kernel frame-to-frame diff ----------------
    # Pair r is (frame r, frame r+1); invalid at batch boundaries (r = b*T-1),
    # past the last real frame, and T == 1 (mask kills everything -> sums 0).
    npairs = rows_pad - 1
    rows = lax.broadcasted_iota(jnp.int32, (npairs, C), 0)
    ok = rows < (N - 1)
    for b in range(1, B + 1):                       # B is small & static here
        ok = ok & (rows != (b * T - 1))
    dsm = jnp.abs(feat[1:, :] - feat[:-1, :]) * ok.astype(f32)
    col_sm = jnp.sum(dsm, axis=0, keepdims=True)    # sublane reduce -> (1, C)
    lane_sm = lax.broadcasted_iota(jnp.int32, (1, C), 1)
    o_ref[5] = jnp.sum(col_sm * (lane_sm >= 128).astype(f32))                    # joints
    o_ref[6] = jnp.sum(col_sm * ((lane_sm >= 3) & (lane_sm < 75)).astype(f32))   # pose
    o_ref[7] = jnp.sum(col_sm * ((lane_sm >= 75) & (lane_sm < 128)).astype(f32)) # betas
    o_ref[8] = jnp.sum(col_sm * (lane_sm < 3).astype(f32))                       # trans


def _fused_sums(kp_pg, pose_pg, feat, gt_bt, *, B, T, N):
    kernel = functools.partial(_fused_loss_kernel, B=B, T=T, N=N)
    return pl.pallas_call(
        kernel,
        out_shape=jax.ShapeDtypeStruct((_N_SUMS,), jnp.float32),
        in_specs=[pl.BlockSpec(memory_space=pltpu.MemorySpace.VMEM)] * 4,
        out_specs=pl.BlockSpec(memory_space=pltpu.MemorySpace.SMEM),
    )(kp_pg, pose_pg, feat, gt_bt)


# ------------------------------- layout glue --------------------------------

def _pad_rows8(x):
    return jnp.pad(x, ((0, (-x.shape[0]) % 8), (0, 0)))


def _pack_coord_pair(pred, gt):
    """(M,3) pred & gt -> (8, pad128(M)): pred xyz rows 0..2, gt xyz rows 4..6."""
    pt = jnp.asarray(pred, jnp.float32).T            # (3, M)
    gt_t = jnp.asarray(gt, jnp.float32).T
    m = pt.shape[1]
    z = jnp.zeros((1, m), jnp.float32)
    packed = jnp.concatenate([pt, z, gt_t, z], axis=0)   # (8, M)
    return jnp.pad(packed, ((0, 0), (0, (-m) % 128)))


@jax.jit
def _hpspi_forward(kp3d, theta, gt_kp3d, gt_betas, gt_pose, gt_trans, weights9):
    f32 = jnp.float32
    B, T = theta.shape[:2]
    J = kp3d.shape[2]
    N = B * T
    n_betas = theta.shape[-1] - 75

    # 3-D keypoints (MSE + MPJPE) and SMPL pose, pred/gt packed into one tile.
    kp_pg = _pack_coord_pair(kp3d[..., :3].reshape(N * J, 3),
                             gt_kp3d.reshape(N * J, 3))
    pose_pg = _pack_coord_pair(theta[..., 3:75].reshape(N * 24, 3),
                               gt_pose.reshape(N * 24, 3))

    # Per-frame feature slab: [theta(85) | 0 -> 128 | kp3d flat | 0 -> ck].
    theta2 = theta.reshape(N, -1).astype(f32)
    th_cols = theta2.shape[1]
    kp_flat = kp3d.reshape(N, -1).astype(f32)
    kcols = kp_flat.shape[1]
    ck = -(-kcols // 128) * 128
    feat = jnp.concatenate(
        [theta2, jnp.zeros((N, 128 - th_cols), f32),
         kp_flat, jnp.zeros((N, ck - kcols), f32)], axis=1)
    feat = _pad_rows8(feat)

    # Per-frame gt slab: [gt_trans(3) | 0(72) | gt_betas | 0 -> 128].
    gt_bt = jnp.concatenate(
        [gt_trans.reshape(N, 3).astype(f32), jnp.zeros((N, 72), f32),
         gt_betas.reshape(N, -1).astype(f32),
         jnp.zeros((N, 128 - 75 - n_betas), f32)], axis=1)
    gt_bt = _pad_rows8(gt_bt)

    s = _fused_sums(kp_pg, pose_pg, feat, gt_bt, B=B, T=T, N=N)

    if T > 1:
        npair = B * (T - 1)
        div = [N * J * 3, N * J, N * 216, N * n_betas, N * 3,
               npair * kcols, npair * 72, npair * n_betas, npair * 3]
    else:  # smoothness sums are exactly 0 from the kernel's row mask
        div = [N * J * 3, N * J, N * 216, N * n_betas, N * 3, 1, 1, 1, 1]
    means = s * jnp.array([1.0 / d for d in div], f32)   # one vectorized divide
    loss = jnp.dot(weights9, means)                       # one dot for 8 FMAs

    zero = f32(0.0)
    loss_dict = {
        't_mpjpe': means[1], 'kp2d': zero, 'kp3d': means[0],
        'trans': means[4], 'pose': means[2], 'shape': means[3],
        'sm_kp': means[5], 'sm_ps': means[6],
        'sm_bt': means[7], 'sm_ts': means[8],
        'proj': zero, 'pen': zero,
    }
    return loss, loss_dict


def hpspi_loss(outputs, gt_keypoints_3d, gt_keypoints_2d, gt_betas, gt_pose,
               gt_trans, gt_pressure_binary,
               e_3d_loss_weight=30.0, e_pose_loss_weight=1.0,
               e_shape_loss_weight=0.01, e_trans_loss_weight=100.0,
               e_smooth_pose_weight=10.0, e_smooth_betas_weight=10.0,
               e_smooth_trans_weight=10.0, e_smooth_joints_weight=10.0):
    # gt_keypoints_2d / gt_pressure_binary are unused by the exercised forward
    # (kp2d / pressure-projection / penetration terms are hard-wired to 0).
    # Weight vector in "means" order: [kp3d, mpjpe(0), pose, shape, trans,
    #                                  sm_joints, sm_pose, sm_betas, sm_trans].
    weights9 = jnp.array([e_3d_loss_weight, 0.0, e_pose_loss_weight,
                          e_shape_loss_weight, e_trans_loss_weight,
                          e_smooth_joints_weight, e_smooth_pose_weight,
                          e_smooth_betas_weight, e_smooth_trans_weight],
                         jnp.float32)
    # loss_dict values stay on device (no .item()/float() host syncs).
    return _hpspi_forward(outputs['kp_3d'], outputs['theta'], gt_keypoints_3d,
                          gt_betas, gt_pose, gt_trans, weights9)


# ---------------------------- pure-JAX reference ----------------------------

def _ref_rodrigues(r):
    rr = r + 1e-8
    angle = jnp.linalg.norm(rr, axis=-1, keepdims=True)
    u = rr / angle
    ux, uy, uz = u[:, 0:1], u[:, 1:2], u[:, 2:3]
    c = jnp.cos(angle)
    s = jnp.sin(angle)
    t = 1.0 - c
    row0 = jnp.concatenate([c + ux * ux * t, ux * uy * t - uz * s, ux * uz * t + uy * s], -1)
    row1 = jnp.concatenate([uy * ux * t + uz * s, c + uy * uy * t, uy * uz * t - ux * s], -1)
    row2 = jnp.concatenate([uz * ux * t - uy * s, uz * uy * t + ux * s, c + uz * uz * t], -1)
    return jnp.stack([row0, row1, row2], axis=-2)


def _ref_loss(outputs, gt_kp3d, gt_betas, gt_pose, gt_trans):
    kp3d, theta = outputs['kp_3d'], outputs['theta']
    B, T = gt_trans.shape[:2]
    sm = lambda x: jnp.mean(jnp.abs(x[:, 1:] - x[:, :-1])) if T > 1 else 0.0
    sj, sp = sm(kp3d), sm(theta[:, :, 3:75])
    sb, st = sm(theta[:, :, 75:]), sm(theta[:, :, :3])
    red = lambda x: x.reshape((B * T,) + x.shape[2:])
    kp3d_f, theta_f = red(kp3d), red(theta)
    g3, gb, gp, gt = red(gt_kp3d), red(gt_betas), red(gt_pose), red(gt_trans)
    kp3 = jnp.mean((kp3d_f[:, :, :3] - g3) ** 2)
    pose = jnp.mean(jnp.abs(_ref_rodrigues(theta_f[:, 3:75].reshape(-1, 3))
                            - _ref_rodrigues(gp.reshape(-1, 3))))
    shape = jnp.mean(jnp.abs(theta_f[:, 75:] - gb))
    trans = jnp.mean(jnp.abs(theta_f[:, :3] - gt))
    mpjpe = jnp.mean(jnp.sqrt(jnp.sum((kp3d_f[:, :, :3] - g3) ** 2, -1)))
    total = (1.0 * pose + 0.01 * shape + 100.0 * trans + 30.0 * kp3
             + 10.0 * sj + 10.0 * sp + 10.0 * sb + 10.0 * st)
    return total, mpjpe


# ----------------------------------- main ------------------------------------

if __name__ == "__main__":
    key = jax.random.PRNGKey(0)
    B, T, J = 2, 8, 24
    ks = jax.random.split(key, 8)

    outputs = {
        'kp_3d': jax.random.normal(ks[0], (B, T, J, 3), jnp.float32),
        'theta': 0.2 * jax.random.normal(ks[1], (B, T, 85), jnp.float32),
    }
    gt_keypoints_3d = jax.random.normal(ks[2], (B, T, J, 3), jnp.float32)
    gt_keypoints_2d = jax.random.normal(ks[3], (B, T, J, 2), jnp.float32)
    gt_betas = jax.random.normal(ks[4], (B, T, 10), jnp.float32)
    gt_pose = 0.2 * jax.random.normal(ks[5], (B, T, 72), jnp.float32)
    gt_trans = jax.random.normal(ks[6], (B, T, 3), jnp.float32)
    gt_pressure_binary = jax.random.normal(ks[7], (B, T, 64, 27), jnp.float32)

    loss, loss_dict = hpspi_loss(outputs, gt_keypoints_3d, gt_keypoints_2d,
                                 gt_betas, gt_pose, gt_trans, gt_pressure_binary)
    loss = jax.block_until_ready(loss)

    ref_loss, ref_mpjpe = _ref_loss(outputs, gt_keypoints_3d, gt_betas,
                                    gt_pose, gt_trans)
    ref_loss = jax.block_until_ready(ref_loss)
    assert jnp.allclose(loss, ref_loss, rtol=2e-3, atol=1e-4), (loss, ref_loss)
    assert jnp.allclose(loss_dict['t_mpjpe'], ref_mpjpe, rtol=2e-3, atol=1e-4), (
        loss_dict['t_mpjpe'], ref_mpjpe)

    print("KERNEL_OK")
</pallas_src>

<mosaic_0001>
module attributes {stable_mosaic.version = 11 : i64} {
  func.func @_fused_loss_kernel(%arg0: memref<8x384xf32, #tpu.memory_space<vmem>>, %arg1: memref<8x384xf32, #tpu.memory_space<vmem>>, %arg2: memref<16x256xf32, #tpu.memory_space<vmem>>, %arg3: memref<16x128xf32, #tpu.memory_space<vmem>>, %arg4: memref<9xf32, #tpu.memory_space<smem>>) attributes {dimension_semantics = [], scalar_prefetch = 0 : i64, scratch_operands = 0 : i64, tpu.core_type = #tpu.core_type<tc>} {
    %c0 = arith.constant 0 : index
    %c0_0 = arith.constant 0 : index
    %0 = vector.load %arg0[%c0, %c0_0] : memref<8x384xf32, #tpu.memory_space<vmem>>, vector<8x384xf32>
    %1 = vector.extract_strided_slice %0 {offsets = [0, 0], sizes = [1, 384], strides = [1, 1]} : vector<8x384xf32> to vector<1x384xf32>
    %2 = vector.extract_strided_slice %0 {offsets = [4, 0], sizes = [1, 384], strides = [1, 1]} : vector<8x384xf32> to vector<1x384xf32>
    %3 = arith.subf %1, %2 : vector<1x384xf32>
    %4 = vector.extract_strided_slice %0 {offsets = [1, 0], sizes = [1, 384], strides = [1, 1]} : vector<8x384xf32> to vector<1x384xf32>
    %5 = vector.extract_strided_slice %0 {offsets = [5, 0], sizes = [1, 384], strides = [1, 1]} : vector<8x384xf32> to vector<1x384xf32>
    %6 = arith.subf %4, %5 : vector<1x384xf32>
    %7 = vector.extract_strided_slice %0 {offsets = [2, 0], sizes = [1, 384], strides = [1, 1]} : vector<8x384xf32> to vector<1x384xf32>
    %8 = vector.extract_strided_slice %0 {offsets = [6, 0], sizes = [1, 384], strides = [1, 1]} : vector<8x384xf32> to vector<1x384xf32>
    %9 = arith.subf %7, %8 : vector<1x384xf32>
    %10 = arith.mulf %3, %3 : vector<1x384xf32>
    %11 = arith.mulf %6, %6 : vector<1x384xf32>
    %12 = arith.addf %10, %11 : vector<1x384xf32>
    %13 = arith.mulf %9, %9 : vector<1x384xf32>
    %14 = arith.addf %12, %13 : vector<1x384xf32>
    %15 = vector.shape_cast %14 : vector<1x384xf32> to vector<1x1x384xf32>
    %cst = arith.constant dense<0.000000e+00> : vector<1xf32>
    %16 = vector.multi_reduction <add>, %15, %cst [1, 2] : vector<1x1x384xf32> to vector<1xf32>
    %17 = vector.shape_cast %16 : vector<1xf32> to vector<1x1x1xf32>
    %18 = vector.extract %17[0, 0, 0] : f32 from vector<1x1x1xf32>
    %c0_1 = arith.constant 0 : index
    %19 = memref.load %arg4[%c0_1] : memref<9xf32, #tpu.memory_space<smem>>
    memref.store %18, %arg4[%c0_1] : memref<9xf32, #tpu.memory_space<smem>>
    %20 = math.sqrt %14 : vector<1x384xf32>
    %21 = vector.shape_cast %20 : vector<1x384xf32> to vector<1x1x384xf32>
    %cst_2 = arith.constant dense<0.000000e+00> : vector<1xf32>
    %22 = vector.multi_reduction <add>, %21, %cst_2 [1, 2] : vector<1x1x384xf32> to vector<1xf32>
    %23 = vector.shape_cast %22 : vector<1xf32> to vector<1x1x1xf32>
    %24 = vector.extract %23[0, 0, 0] : f32 from vector<1x1x1xf32>
    %c1 = arith.constant 1 : index
    %25 = memref.load %arg4[%c1] : memref<9xf32, #tpu.memory_space<smem>>
    memref.store %24, %arg4[%c1] : memref<9xf32, #tpu.memory_space<smem>>
    %c0_3 = arith.constant 0 : index
    %c0_4 = arith.constant 0 : index
    %26 = vector.load %arg1[%c0_3, %c0_4] : memref<8x384xf32, #tpu.memory_space<vmem>>, vector<8x384xf32>
    %27 = vector.extract_strided_slice %26 {offsets = [0, 0], sizes = [1, 384], strides = [1, 1]} : vector<8x384xf32> to vector<1x384xf32>
    %28 = vector.extract_strided_slice %26 {offsets = [1, 0], sizes = [1, 384], strides = [1, 1]} : vector<8x384xf32> to vector<1x384xf32>
    %29 = vector.extract_strided_slice %26 {offsets = [2, 0], sizes = [1, 384], strides = [1, 1]} : vector<8x384xf32> to vector<1x384xf32>
    %cst_5 = arith.constant 9.99999993E-9 : f32
    %30 = vector.broadcast %cst_5 : f32 to vector<1x384xf32>
    %31 = arith.addf %27, %30 : vector<1x384xf32>
    %cst_6 = arith.constant 9.99999993E-9 : f32
    %32 = vector.broadcast %cst_6 : f32 to vector<1x384xf32>
    %33 = arith.addf %28, %32 : vector<1x384xf32>
    %cst_7 = arith.constant 9.99999993E-9 : f32
    %34 = vector.broadcast %cst_7 : f32 to vector<1x384xf32>
    %35 = arith.addf %29, %34 : vector<1x384xf32>
    %36 = arith.mulf %31, %31 : vector<1x384xf32>
    %37 = arith.mulf %33, %33 : vector<1x384xf32>
    %38 = arith.addf %36, %37 : vector<1x384xf32>
    %39 = arith.mulf %35, %35 : vector<1x384xf32>
    %40 = arith.addf %38, %39 : vector<1x384xf32>
    %41 = math.rsqrt %40 : vector<1x384xf32>
    %42 = arith.mulf %40, %41 : vector<1x384xf32>
    %43 = arith.mulf %31, %41 : vector<1x384xf32>
    %44 = arith.mulf %33, %41 : vector<1x384xf32>
    %45 = arith.mulf %35, %41 : vector<1x384xf32>
    %46 = math.cos %42 : vector<1x384xf32>
    %47 = math.sin %42 : vector<1x384xf32>
    %cst_8 = arith.constant 1.000000e+00 : f32
    %48 = vector.broadcast %cst_8 : f32 to vector<1x384xf32>
    %49 = arith.subf %48, %46 : vector<1x384xf32>
    %50 = arith.mulf %43, %43 : vector<1x384xf32>
    %51 = arith.mulf %50, %49 : vector<1x384xf32>
    %52 = arith.addf %46, %51 : vector<1x384xf32>
    %53 = arith.mulf %43, %44 : vector<1x384xf32>
    %54 = arith.mulf %53, %49 : vector<1x384xf32>
    %55 = arith.mulf %45, %47 : vector<1x384xf32>
    %56 = arith.subf %54, %55 : vector<1x384xf32>
    %57 = arith.mulf %43, %45 : vector<1x384xf32>
    %58 = arith.mulf %57, %49 : vector<1x384xf32>
    %59 = arith.mulf %44, %47 : vector<1x384xf32>
    %60 = arith.addf %58, %59 : vector<1x384xf32>
    %61 = arith.mulf %44, %43 : vector<1x384xf32>
    %62 = arith.mulf %61, %49 : vector<1x384xf32>
    %63 = arith.mulf %45, %47 : vector<1x384xf32>
    %64 = arith.addf %62, %63 : vector<1x384xf32>
    %65 = arith.mulf %44, %44 : vector<1x384xf32>
    %66 = arith.mulf %65, %49 : vector<1x384xf32>
    %67 = arith.addf %46, %66 : vector<1x384xf32>
    %68 = arith.mulf %44, %45 : vector<1x384xf32>
    %69 = arith.mulf %68, %49 : vector<1x384xf32>
    %70 = arith.mulf %43, %47 : vector<1x384xf32>
    %71 = arith.subf %69, %70 : vector<1x384xf32>
    %72 = arith.mulf %45, %43 : vector<1x384xf32>
    %73 = arith.mulf %72, %49 : vector<1x384xf32>
    %74 = arith.mulf %44, %47 : vector<1x384xf32>
    %75 = arith.subf %73, %74 : vector<1x384xf32>
    %76 = arith.mulf %45, %44 : vector<1x384xf32>
    %77 = arith.mulf %76, %49 : vector<1x384xf32>
    %78 = arith.mulf %43, %47 : vector<1x384xf32>
    %79 = arith.addf %77, %78 : vector<1x384xf32>
    %80 = arith.mulf %45, %45 : vector<1x384xf32>
    %81 = arith.mulf %80, %49 : vector<1x384xf32>
    %82 = arith.addf %46, %81 : vector<1x384xf32>
    %83 = vector.extract_strided_slice %26 {offsets = [4, 0], sizes = [1, 384], strides = [1, 1]} : vector<8x384xf32> to vector<1x384xf32>
    %84 = vector.extract_strided_slice %26 {offsets = [5, 0], sizes = [1, 384], strides = [1, 1]} : vector<8x384xf32> to vector<1x384xf32>
    %85 = vector.extract_strided_slice %26 {offsets = [6, 0], sizes = [1, 384], strides = [1, 1]} : vector<8x384xf32> to vector<1x384xf32>
    %cst_9 = arith.constant 9.99999993E-9 : f32
    %86 = vector.broadcast %cst_9 : f32 to vector<1x384xf32>
    %87 = arith.addf %83, %86 : vector<1x384xf32>
    %cst_10 = arith.constant 9.99999993E-9 : f32
    %88 = vector.broadcast %cst_10 : f32 to vector<1x384xf32>
    %89 = arith.addf %84, %88 : vector<1x384xf32>
    %cst_11 = arith.constant 9.99999993E-9 : f32
    %90 = vector.broadcast %cst_11 : f32 to vector<1x384xf32>
    %91 = arith.addf %85, %90 : vector<1x384xf32>
    %92 = arith.mulf %87, %87 : vector<1x384xf32>
    %93 = arith.mulf %89, %89 : vector<1x384xf32>
    %94 = arith.addf %92, %93 : vector<1x384xf32>
    %95 = arith.mulf %91, %91 : vector<1x384xf32>
    %96 = arith.addf %94, %95 : vector<1x384xf32>
    %97 = math.rsqrt %96 : vector<1x384xf32>
    %98 = arith.mulf %96, %97 : vector<1x384xf32>
    %99 = arith.mulf %87, %97 : vector<1x384xf32>
    %100 = arith.mulf %89, %97 : vector<1x384xf32>
    %101 = arith.mulf %91, %97 : vector<1x384xf32>
    %102 = math.cos %98 : vector<1x384xf32>
    %103 = math.sin %98 : vector<1x384xf32>
    %cst_12 = arith.constant 1.000000e+00 : f32
    %104 = vector.broadcast %cst_12 : f32 to vector<1x384xf32>
    %105 = arith.subf %104, %102 : vector<1x384xf32>
    %106 = arith.mulf %99, %99 : vector<1x384xf32>
    %107 = arith.mulf %106, %105 : vector<1x384xf32>
    %108 = arith.addf %102, %107 : vector<1x384xf32>
    %109 = arith.mulf %99, %100 : vector<1x384xf32>
    %110 = arith.mulf %109, %105 : vector<1x384xf32>
    %111 = arith.mulf %101, %103 : vector<1x384xf32>
    %112 = arith.subf %110, %111 : vector<1x384xf32>
    %113 = arith.mulf %99, %101 : vector<1x384xf32>
    %114 = arith.mulf %113, %105 : vector<1x384xf32>
    %115 = arith.mulf %100, %103 : vector<1x384xf32>
    %116 = arith.addf %114, %115 : vector<1x384xf32>
    %117 = arith.mulf %100, %99 : vector<1x384xf32>
    %118 = arith.mulf %117, %105 : vector<1x384xf32>
    %119 = arith.mulf %101, %103 : vector<1x384xf32>
    %120 = arith.addf %118, %119 : vector<1x384xf32>
    %121 = arith.mulf %100, %100 : vector<1x384xf32>
    %122 = arith.mulf %121, %105 : vector<1x384xf32>
    %123 = arith.addf %102, %122 : vector<1x384xf32>
    %124 = arith.mulf %100, %101 : vector<1x384xf32>
    %125 = arith.mulf %124, %105 : vector<1x384xf32>
    %126 = arith.mulf %99, %103 : vector<1x384xf32>
    %127 = arith.subf %125, %126 : vector<1x384xf32>
    %128 = arith.mulf %101, %99 : vector<1x384xf32>
    %129 = arith.mulf %128, %105 : vector<1x384xf32>
    %130 = arith.mulf %100, %103 : vector<1x384xf32>
    %131 = arith.subf %129, %130 : vector<1x384xf32>
    %132 = arith.mulf %101, %100 : vector<1x384xf32>
    %133 = arith.mulf %132, %105 : vector<1x384xf32>
    %134 = arith.mulf %99, %103 : vector<1x384xf32>
    %135 = arith.addf %133, %134 : vector<1x384xf32>
    %136 = arith.mulf %101, %101 : vector<1x384xf32>
    %137 = arith.mulf %136, %105 : vector<1x384xf32>
    %138 = arith.addf %102, %137 : vector<1x384xf32>
    %139 = arith.subf %52, %108 : vector<1x384xf32>
    %140 = math.absf %139 : vector<1x384xf32>
    %141 = arith.subf %56, %112 : vector<1x384xf32>
    %142 = math.absf %141 : vector<1x384xf32>
    %143 = arith.addf %140, %142 : vector<1x384xf32>
    %144 = arith.subf %60, %116 : vector<1x384xf32>
    %145 = math.absf %144 : vector<1x384xf32>
    %146 = arith.addf %143, %145 : vector<1x384xf32>
    %147 = arith.subf %64, %120 : vector<1x384xf32>
    %148 = math.absf %147 : vector<1x384xf32>
    %149 = arith.addf %146, %148 : vector<1x384xf32>
    %150 = arith.subf %67, %123 : vector<1x384xf32>
    %151 = math.absf %150 : vector<1x384xf32>
    %152 = arith.addf %149, %151 : vector<1x384xf32>
    %153 = arith.subf %71, %127 : vector<1x384xf32>
    %154 = math.absf %153 : vector<1x384xf32>
    %155 = arith.addf %152, %154 : vector<1x384xf32>
    %156 = arith.subf %75, %131 : vector<1x384xf32>
    %157 = math.absf %156 : vector<1x384xf32>
    %158 = arith.addf %155, %157 : vector<1x384xf32>
    %159 = arith.subf %79, %135 : vector<1x384xf32>
    %160 = math.absf %159 : vector<1x384xf32>
    %161 = arith.addf %158, %160 : vector<1x384xf32>
    %162 = arith.subf %82, %138 : vector<1x384xf32>
    %163 = math.absf %162 : vector<1x384xf32>
    %164 = arith.addf %161, %163 : vector<1x384xf32>
    %165 = vector.shape_cast %164 : vector<1x384xf32> to vector<1x1x384xf32>
    %cst_13 = arith.constant dense<0.000000e+00> : vector<1xf32>
    %166 = vector.multi_reduction <add>, %165, %cst_13 [1, 2] : vector<1x1x384xf32> to vector<1xf32>
    %167 = vector.shape_cast %166 : vector<1xf32> to vector<1x1x1xf32>
    %168 = vector.extract %167[0, 0, 0] : f32 from vector<1x1x1xf32>
    %c2 = arith.constant 2 : index
    %169 = memref.load %arg4[%c2] : memref<9xf32, #tpu.memory_space<smem>>
    memref.store %168, %arg4[%c2] : memref<9xf32, #tpu.memory_space<smem>>
    %c0_14 = arith.constant 0 : index
    %c0_15 = arith.constant 0 : index
    %170 = vector.load %arg2[%c0_14, %c0_15] : memref<16x256xf32, #tpu.memory_space<vmem>>, vector<16x256xf32>
    %171 = vector.extract_strided_slice %170 {offsets = [0, 0], sizes = [16, 128], strides = [1, 1]} : vector<16x256xf32> to vector<16x128xf32>
    %c0_16 = arith.constant 0 : index
    %c0_17 = arith.constant 0 : index
    %172 = vector.load %arg3[%c0_16, %c0_17] : memref<16x128xf32, #tpu.memory_space<vmem>>, vector<16x128xf32>
    %173 = arith.subf %171, %172 : vector<16x128xf32>
    %174 = math.absf %173 : vector<16x128xf32>
    %cst_18 = arith.constant dense<0.000000e+00> : vector<128xf32>
    %175 = vector.multi_reduction <add>, %174, %cst_18 [0] : vector<16x128xf32> to vector<128xf32>
    %176 = vector.shape_cast %175 : vector<128xf32> to vector<1x128xf32>
    %177 = tpu.iota {dimensions = array<i32: 1>} : vector<1x128xi32>
    %c75_i32 = arith.constant 75 : i32
    %178 = vector.broadcast %c75_i32 : i32 to vector<1x128xi32>
    %179 = arith.cmpi sge, %177, %178 : vector<1x128xi32>
    %180 = arith.extui %179 : vector<1x128xi1> to vector<1x128xi32>
    %181 = arith.sitofp %180 : vector<1x128xi32> to vector<1x128xf32>
    %182 = arith.mulf %176, %181 : vector<1x128xf32>
    %183 = vector.shape_cast %182 : vector<1x128xf32> to vector<1x1x128xf32>
    %cst_19 = arith.constant dense<0.000000e+00> : vector<1xf32>
    %184 = vector.multi_reduction <add>, %183, %cst_19 [1, 2] : vector<1x1x128xf32> to vector<1xf32>
    %185 = vector.shape_cast %184 : vector<1xf32> to vector<1x1x1xf32>
    %186 = vector.extract %185[0, 0, 0] : f32 from vector<1x1x1xf32>
    %c3 = arith.constant 3 : index
    %187 = memref.load %arg4[%c3] : memref<9xf32, #tpu.memory_space<smem>>
    memref.store %186, %arg4[%c3] : memref<9xf32, #tpu.memory_space<smem>>
    %c3_i32 = arith.constant 3 : i32
    %188 = vector.broadcast %c3_i32 : i32 to vector<1x128xi32>
    %189 = arith.cmpi slt, %177, %188 : vector<1x128xi32>
    %190 = arith.extui %189 : vector<1x128xi1> to vector<1x128xi32>
    %191 = arith.sitofp %190 : vector<1x128xi32> to vector<1x128xf32>
    %192 = arith.mulf %176, %191 : vector<1x128xf32>
    %193 = vector.shape_cast %192 : vector<1x128xf32> to vector<1x1x128xf32>
    %cst_20 = arith.constant dense<0.000000e+00> : vector<1xf32>
    %194 = vector.multi_reduction <add>, %193, %cst_20 [1, 2] : vector<1x1x128xf32> to vector<1xf32>
    %195 = vector.shape_cast %194 : vector<1xf32> to vector<1x1x1xf32>
    %196 = vector.extract %195[0, 0, 0] : f32 from vector<1x1x1xf32>
    %c4 = arith.constant 4 : index
    %197 = memref.load %arg4[%c4] : memref<9xf32, #tpu.memory_space<smem>>
    memref.store %196, %arg4[%c4] : memref<9xf32, #tpu.memory_space<smem>>
    %198 = tpu.iota {dimensions = array<i32: 0>} : vector<15x256xi32>
    %c15_i32 = arith.constant 15 : i32
    %199 = vector.broadcast %c15_i32 : i32 to vector<15x256xi32>
    %200 = arith.cmpi slt, %198, %199 : vector<15x256xi32>
    %c7_i32 = arith.constant 7 : i32
    %201 = vector.broadcast %c7_i32 : i32 to vector<15x256xi32>
    %202 = arith.cmpi ne, %198, %201 : vector<15x256xi32>
    %203 = arith.andi %200, %202 : vector<15x256xi1>
    %c15_i32_21 = arith.constant 15 : i32
    %204 = vector.broadcast %c15_i32_21 : i32 to vector<15x256xi32>
    %205 = arith.cmpi ne, %198, %204 : vector<15x256xi32>
    %206 = arith.andi %203, %205 : vector<15x256xi1>
    %207 = vector.extract_strided_slice %170 {offsets = [1, 0], sizes = [15, 256], strides = [1, 1]} : vector<16x256xf32> to vector<15x256xf32>
    %208 = vector.extract_strided_slice %170 {offsets = [0, 0], sizes = [15, 256], strides = [1, 1]} : vector<16x256xf32> to vector<15x256xf32>
    %209 = arith.subf %207, %208 : vector<15x256xf32>
    %210 = math.absf %209 : vector<15x256xf32>
    %211 = arith.extui %206 : vector<15x256xi1> to vector<15x256xi32>
    %212 = arith.sitofp %211 : vector<15x256xi32> to vector<15x256xf32>
    %213 = arith.mulf %210, %212 : vector<15x256xf32>
    %cst_22 = arith.constant dense<0.000000e+00> : vector<256xf32>
    %214 = vector.multi_reduction <add>, %213, %cst_22 [0] : vector<15x256xf32> to vector<256xf32>
    %215 = vector.shape_cast %214 : vector<256xf32> to vector<1x256xf32>
    %216 = tpu.iota {dimensions = array<i32: 1>} : vector<1x256xi32>
    %c128_i32 = arith.constant 128 : i32
    %217 = vector.broadcast %c128_i32 : i32 to vector<1x256xi32>
    %218 = arith.cmpi sge, %216, %217 : vector<1x256xi32>
    %219 = arith.extui %218 : vector<1x256xi1> to vector<1x256xi32>
    %220 = arith.sitofp %219 : vector<1x256xi32> to vector<1x256xf32>
    %221 = arith.mulf %215, %220 : vector<1x256xf32>
    %222 = vector.shape_cast %221 : vector<1x256xf32> to vector<1x1x256xf32>
    %cst_23 = arith.constant dense<0.000000e+00> : vector<1xf32>
    %223 = vector.multi_reduction <add>, %222, %cst_23 [1, 2] : vector<1x1x256xf32> to vector<1xf32>
    %224 = vector.shape_cast %223 : vector<1xf32> to vector<1x1x1xf32>
    %225 = vector.extract %224[0, 0, 0] : f32 from vector<1x1x1xf32>
    %c5 = arith.constant 5 : index
    %226 = memref.load %arg4[%c5] : memref<9xf32, #tpu.memory_space<smem>>
    memref.store %225, %arg4[%c5] : memref<9xf32, #tpu.memory_space<smem>>
    %c3_i32_24 = arith.constant 3 : i32
    %227 = vector.broadcast %c3_i32_24 : i32 to vector<1x256xi32>
    %228 = arith.cmpi sge, %216, %227 : vector<1x256xi32>
    %c75_i32_25 = arith.constant 75 : i32
    %229 = vector.broadcast %c75_i32_25 : i32 to vector<1x256xi32>
    %230 = arith.cmpi slt, %216, %229 : vector<1x256xi32>
    %231 = arith.andi %228, %230 : vector<1x256xi1>
    %232 = arith.extui %231 : vector<1x256xi1> to vector<1x256xi32>
    %233 = arith.sitofp %232 : vector<1x256xi32> to vector<1x256xf32>
    %234 = arith.mulf %215, %233 : vector<1x256xf32>
    %235 = vector.shape_cast %234 : vector<1x256xf32> to vector<1x1x256xf32>
    %cst_26 = arith.constant dense<0.000000e+00> : vector<1xf32>
    %236 = vector.multi_reduction <add>, %235, %cst_26 [1, 2] : vector<1x1x256xf32> to vector<1xf32>
    %237 = vector.shape_cast %236 : vector<1xf32> to vector<1x1x1xf32>
    %238 = vector.extract %237[0, 0, 0] : f32 from vector<1x1x1xf32>
    %c6 = arith.constant 6 : index
    %239 = memref.load %arg4[%c6] : memref<9xf32, #tpu.memory_space<smem>>
    memref.store %238, %arg4[%c6] : memref<9xf32, #tpu.memory_space<smem>>
    %c75_i32_27 = arith.constant 75 : i32
    %240 = vector.broadcast %c75_i32_27 : i32 to vector<1x256xi32>
    %241 = arith.cmpi sge, %216, %240 : vector<1x256xi32>
    %c128_i32_28 = arith.constant 128 : i32
    %242 = vector.broadcast %c128_i32_28 : i32 to vector<1x256xi32>
    %243 = arith.cmpi slt, %216, %242 : vector<1x256xi32>
    %244 = arith.andi %241, %243 : vector<1x256xi1>
    %245 = arith.extui %244 : vector<1x256xi1> to vector<1x256xi32>
    %246 = arith.sitofp %245 : vector<1x256xi32> to vector<1x256xf32>
    %247 = arith.mulf %215, %246 : vector<1x256xf32>
    %248 = vector.shape_cast %247 : vector<1x256xf32> to vector<1x1x256xf32>
    %cst_29 = arith.constant dense<0.000000e+00> : vector<1xf32>
    %249 = vector.multi_reduction <add>, %248, %cst_29 [1, 2] : vector<1x1x256xf32> to vector<1xf32>
    %250 = vector.shape_cast %249 : vector<1xf32> to vector<1x1x1xf32>
    %251 = vector.extract %250[0, 0, 0] : f32 from vector<1x1x1xf32>
    %c7 = arith.constant 7 : index
    %252 = memref.load %arg4[%c7] : memref<9xf32, #tpu.memory_space<smem>>
    memref.store %251, %arg4[%c7] : memref<9xf32, #tpu.memory_space<smem>>
    %c3_i32_30 = arith.constant 3 : i32
    %253 = vector.broadcast %c3_i32_30 : i32 to vector<1x256xi32>
    %254 = arith.cmpi slt, %216, %253 : vector<1x256xi32>
    %255 = arith.extui %254 : vector<1x256xi1> to vector<1x256xi32>
    %256 = arith.sitofp %255 : vector<1x256xi32> to vector<1x256xf32>
    %257 = arith.mulf %215, %256 : vector<1x256xf32>
    %258 = vector.shape_cast %257 : vector<1x256xf32> to vector<1x1x256xf32>
    %cst_31 = arith.constant dense<0.000000e+00> : vector<1xf32>
    %259 = vector.multi_reduction <add>, %258, %cst_31 [1, 2] : vector<1x1x256xf32> to vector<1xf32>
    %260 = vector.shape_cast %259 : vector<1xf32> to vector<1x1x1xf32>
    %261 = vector.extract %260[0, 0, 0] : f32 from vector<1x1x1xf32>
    %c8 = arith.constant 8 : index
    %262 = memref.load %arg4[%c8] : memref<9xf32, #tpu.memory_space<smem>>
    memref.store %261, %arg4[%c8] : memref<9xf32, #tpu.memory_space<smem>>
    return
  }
}

</mosaic_0001>

<llo_original>
// kernel: _hpspi_forward.1
$region0: #{_hpspi_forward.1}
  #allocation0 [shape = 'u32[]', space=smem, size = 0x4, offset = 0x4, fixed_abs, tag = 'smem constant byte address 0x4 - core index']
  #allocation1 [shape = 'u32[144,128]{1,0:T(1,128)}', space=vmem, size = 0x12000, scoped, tag = 'internal scratch']
  %s0 = inlined_call_operand.vmem [shape: f32[8,384], index: 0, kind: input, shape index: {}]
  %s1 = inlined_call_operand.vmem [shape: f32[8,384], index: 1, kind: input, shape index: {}]
  %s2 = inlined_call_operand.vmem [shape: f32[16,256], index: 2, kind: input, shape index: {}]
  %s3 = inlined_call_operand.vmem [shape: f32[16,128], index: 3, kind: input, shape index: {}]
  %s4 = inlined_call_operand.vmem [shape: f32[9], index: 4, kind: output, shape index: {}]
  %s5 = sld [smem:[#allocation0]]
  $region26: #{_hpspi_forward.1} parent=0
    _
  %s7 = ssub.s32 1, %s5
  %s8 = scalar_select 0, %s7, %s5
  $region1: #{_hpspi_forward.1} parent=0
    #allocation2 [shape = 'u8[512]{0}', space=smem, size = 0x200, scoped, tag = 'output window, operand 0, single buffered']
    #allocation3 [shape = 's32[1]{0}', space=sflag, size = 0x4, scoped, tag = 'scoped memory for _hpspi_forward.1']
    %9 = vsyncpa [#allocation3], 0
    // Predicated region
    $region2: #{_hpspi_forward.1} parent=1 // pred_check
      _
    $region3: #{_hpspi_forward.1} parent=1 // pred_check_branch
      %11 = sbr.rel (0) target = $region5
    $region4: #{_hpspi_forward.1} parent=1 // pred_region
      _
    $region5: #{_hpspi_forward.1} parent=1 // pred_fallthru
      _
    // Predicated region
    $region6: #{_hpspi_forward.1} parent=1 // pred_check
      _
    $region7: #{_hpspi_forward.1} parent=1 // pred_check_branch
      %13 = sbr.rel (0) target = $region9
    $region8: #{_hpspi_forward.1} parent=1 // pred_region
      _
    $region9: #{_hpspi_forward.1} parent=1 // pred_fallthru
      _
    // Predicated region
    $region10: #{_hpspi_forward.1} parent=1 // pred_check
      _
    $region11: #{_hpspi_forward.1} parent=1 // pred_check_branch
      %15 = sbr.rel (0) target = $region13
    $region12: #{_hpspi_forward.1} parent=1 // pred_region
      _
    $region13: #{_hpspi_forward.1} parent=1 // pred_fallthru
      _
    // Predicated region
    $region14: #{_hpspi_forward.1} parent=1 // pred_check
      _
    $region15: #{_hpspi_forward.1} parent=1 // pred_check_branch
      %17 = sbr.rel (0) target = $region17
    $region16: #{_hpspi_forward.1} parent=1 // pred_region
      _
    $region17: #{_hpspi_forward.1} parent=1 // pred_fallthru
      _
    %v18 = vld [vmem:[%s0] sm:$0xff]
    %v19 = vld [vmem:[%s0 + $0x8] sm:$0xff]
    %v20 = vld [vmem:[%s0 + $0x10] sm:$0xff]
    %v24 = vrot.slane %v18, 4
    %v25 = vrot.slane %v19, 4
    %v26 = vrot.slane %v20, 4
    %v30 = vsub.f32 %v18, %v24
    %v31 = vsub.f32 %v19, %v25
    %v32 = vsub.f32 %v20, %v26
    %v33 = vmul.f32 %v30, %v30
    %v34 = vmul.f32 %v31, %v31
    %v35 = vmul.f32 %v32, %v32
    %v39 = vrot.slane %v33, 1
    %v40 = vrot.slane %v34, 1
    %v41 = vrot.slane %v35, 1
    %v45 = vadd.f32 %v33, %v39
    %v46 = vadd.f32 %v34, %v40
    %v47 = vadd.f32 %v35, %v41
    %v48 = vrot.slane %v33, 2
    %v49 = vrot.slane %v34, 2
    %v50 = vrot.slane %v35, 2
    %v54 = vadd.f32 %v45, %v48
    %v55 = vadd.f32 %v46, %v49
    %v56 = vadd.f32 %v47, %v50
    %vm57 = vcmask 1040384
    %v58 = vsel %vm57, %v54, 0.0
    %v59 = vsel %vm57, %v55, 0.0
    %v60 = vadd.f32 %v58, %v59
    %v61 = vsel %vm57, %v56, 0.0
    %v62 = vadd.f32 %v60, %v61
    %63 = vadd.xlane.f32.xlu0 %v62
    %v64 = vpop.xlane.xlu0 %63
    %v65 = vrot.slane %v64, 4
    %v66 = vadd.f32 %v64, %v65
    %v67 = vrot.slane %v66, 2
    %v68 = vadd.f32 %v66, %v67
    %v69 = vrot.slane %v68, 1
    %v70 = vadd.f32 %v68, %v69
    %s71 = vtos %v70
    %s72 = scalar_lea.smem [#allocation2], 0
    %73 = sst [smem:[%s72]] %s71
    %v74 = vrsqrt.pop %v54
    %v75 = vmul.f32 %v54, %v74
    %vm76 = vcmp.eq.f32.partialorder %v54, inf
    %v77 = vsel %vm76, %v54, %v75
    %vm78 = vcmp.eq.f32.partialorder %v54, 0.0
    %v79 = vand.u32 %v54, 2147483648
    %v80 = vsel %vm78, %v79, %v77
    %v81 = vrsqrt.pop %v55
    %v82 = vmul.f32 %v55, %v81
    %vm83 = vcmp.eq.f32.partialorder %v55, inf
    %v84 = vsel %vm83, %v55, %v82
    %vm85 = vcmp.eq.f32.partialorder %v55, 0.0
    %v86 = vand.u32 %v55, 2147483648
    %v87 = vsel %vm85, %v86, %v84
    %v88 = vrsqrt.pop %v56
    %v89 = vmul.f32 %v56, %v88
    %vm90 = vcmp.eq.f32.partialorder %v56, inf
    %v91 = vsel %vm90, %v56, %v89
    %vm92 = vcmp.eq.f32.partialorder %v56, 0.0
    %v93 = vand.u32 %v56, 2147483648
    %v94 = vsel %vm92, %v93, %v91
    %v95 = vsel %vm57, %v80, 0.0
    %v96 = vsel %vm57, %v87, 0.0
    %v97 = vadd.f32 %v95, %v96
    %v98 = vsel %vm57, %v94, 0.0
    %v99 = vadd.f32 %v97, %v98
    %100 = vadd.xlane.f32.xlu0 %v99
    %v101 = vpop.xlane.xlu0 %100
    %v102 = vrot.slane %v101, 4
    %v103 = vadd.f32 %v101, %v102
    %v104 = vrot.slane %v103, 2
    %v105 = vadd.f32 %v103, %v104
    %v106 = vrot.slane %v105, 1
    %v107 = vadd.f32 %v105, %v106
    %s108 = vtos %v107
    %s109 = scalar_lea.smem [#allocation2], 1
    %110 = sst [smem:[%s109]] %s108
    %v111 = vld [vmem:[%s1] sm:$0xff]
    %v112 = vld [vmem:[%s1 + $0x8] sm:$0xff]
    %v113 = vld [vmem:[%s1 + $0x10] sm:$0xff]
    %v114 = vadd.f32 %v111, 1e-08
    %v115 = vadd.f32 %v112, 1e-08
    %v116 = vadd.f32 %v113, 1e-08
    %v117 = vmul.f32 %v114, %v114
    %v118 = vmul.f32 %v115, %v115
    %v119 = vmul.f32 %v116, %v116
    %v123 = vrot.slane %v117, 1
    %v124 = vrot.slane %v118, 1
    %v125 = vrot.slane %v119, 1
    %v129 = vadd.f32 %v117, %v123
    %v130 = vadd.f32 %v118, %v124
    %v131 = vadd.f32 %v119, %v125
    %v132 = vrot.slane %v117, 2
    %v133 = vrot.slane %v118, 2
    %v134 = vrot.slane %v119, 2
    %v138 = vadd.f32 %v129, %v132
    %v139 = vadd.f32 %v130, %v133
    %v140 = vadd.f32 %v131, %v134
    %v141 = vrsqrt.pop %v138
    %v142 = vrsqrt.pop %v139
    %v143 = vrsqrt.pop %v140
    %v144 = vmul.f32 %v138, %v141
    %v145 = vmul.f32 %v139, %v142
    %v146 = vmul.f32 %v140, %v143
    %v147 = vmul.f32 %v114, %v141
    %v148 = vmul.f32 %v115, %v142
    %v149 = vmul.f32 %v116, %v143
    %v153 = vrot.slane %v141, 7
    %v154 = vrot.slane %v142, 7
    %v155 = vrot.slane %v143, 7
    %v159 = vmul.f32 %v114, %v153
    %v160 = vmul.f32 %v115, %v154
    %v161 = vmul.f32 %v116, %v155
    %v162 = vrot.slane %v141, 6
    %v163 = vrot.slane %v142, 6
    %v164 = vrot.slane %v143, 6
    %v168 = vmul.f32 %v114, %v162
    %v169 = vmul.f32 %v115, %v163
    %v170 = vmul.f32 %v116, %v164
    %v171 = vand.u32 2147483647, %v144
    %vm172 = vcmp.le.f32.partialorder %v171, 0.7853982
    %vm173 = vcmp.lt.s32.totalorder %v144, 0
    %v174 = vand.u32 %v144, 2139095040
    %v175 = vshrl.u32 %v174, 23
    %v176 = vsub.s32 %v175, 127
    %v177 = vand.u32 2147483647, %v144
    %v178 = vand.u32 %v177, 8388607
    %v179 = vor.u32 %v178, 8388608
    %v180 = vsub.s32 0, %v179
    %v181 = vadd.s32 %v176, 1
    %vm182 = vcmp.gt.s32.totalorder %v181, 0
    %v183 = vsel %vm182, %v181, 0
    %v184 = vshrl.u32 %v183, 5
    %v185 = vand.u32 %v183, 31
    %v186 = vsub.s32 32, %v185
    %v187 = vshrl.u32 683565275, %v186
    %v188 = vshll.u32 683565275, %v185
    %v189 = vshrl.u32 2475754826, %v186
    %v190 = vor.u32 %v188, %v189
    %v191 = vshll.u32 2475754826, %v185
    %v192 = vshrl.u32 2131351028, %v186
    %v193 = vor.u32 %v191, %v192
    %v194 = vshll.u32 2131351028, %v185
    %v195 = vshrl.u32 2102212464, %v186
    %v196 = vor.u32 %v194, %v195
    %v197 = vshll.u32 2102212464, %v185
    %v198 = vshrl.u32 920167782, %v186
    %v199 = vor.u32 %v197, %v198
    %v200 = vshll.u32 920167782, %v185
    %v201 = vshrl.u32 1326507024, %v186
    %v202 = vor.u32 %v200, %v201
    %vm203 = vcmp.lt.s32.totalorder %v184, 1
    %vm204 = vcmp.lt.s32.totalorder %v184, 2
    %vm205 = vcmp.lt.s32.totalorder %v184, 3
    %vm206 = vcmp.lt.s32.totalorder %v184, 4
    %v207 = vsel %vm203, %v187, %v190
    %v208 = vsel %vm206, %v196, 2102212464
    %v209 = vsel %vm205, %v193, %v208
    %v210 = vsel %vm204, %v207, %v209
    %v211 = vsel %vm203, %v190, %v193
    %v212 = vsel %vm206, %v199, 920167782
    %v213 = vsel %vm205, %v196, %v212
    %v214 = vsel %vm204, %v211, %v213
    %v215 = vsel %vm203, %v193, %v196
    %v216 = vsel %vm206, %v202, 1326507024
    %v217 = vsel %vm205, %v199, %v216
    %v218 = vsel %vm204, %v215, %v217
    %v219 = vshll.u32 %v179, 8
    %v220 = vmul.u32.u64.compose %v219, %v218
    %v221 = vextract.low.u32 %v220
    %v222 = vextract.high.u32 %v220
    %v223 = vmul.u32.u64.compose %v219, %v214
    %v224 = vextract.low.u32 %v223
    %v225 = vextract.high.u32 %v223
    %v226 = vmul.u32 %v219, %v210
    %v227 = vadd.s32 %v222, %v224
    %vm228 = vc.u32 %v222, %v224
    %v229 = vadd.s32 %v225, 1
    %v230 = vsel %vm228, %v229, %v225
    %v231 = vadd.s32 %v226, %v230
    %v232 = vadd.s32 %v231, 536870912
    %v233 = vshrl.u32 %v232, 30
    %v234 = vshll.u32 %v233, 30
    %v235 = vsub.s32 %v231, %v234
    %vm236 = vcmp.lt.s32.totalorder %v235, 0
    %v237 = vsub.s32 0, %v235
    %v238 = vsel %vm236, %v237, %v235
    %v239 = vclz %v238
    %v240 = vsub.s32 %v239, 2
    %vm241 = vcmp.gt.s32.totalorder 0, %v240
    %v242 = vsel %vm241, 0, %v240
    %v243 = vsub.s32 32, %v242
    %v244 = vshll.u32 %v235, %v242
    %v245 = vshrl.u32 %v227, %v243
    %v246 = vor.u32 %v244, %v245
    %v247 = vsub.s32 4294967266, %v242
    %v248 = vadd.s32 %v247, 127
    %v249 = vshll.u32 %v248, 23
    %v250 = vor.u32 4788187, %v249
    %v251 = vand.u32 2147483647, %v250
    %v253 = vcvt.s32.f32 %v246
    %v254 = vmul.f32 %v253, %v251
    %v255 = vxor.u32 %v254, 2147483648
    %v256 = vsel %vm173, %v255, %v254
    %v257 = vsub.s32 4, %v233
    %v258 = vsel %vm173, %v257, %v233
    %v259 = vsel %vm172, %v144, %v256
    %v260 = vsel %vm172, 0, %v258
    %v261 = vcosq.f32.pop %v259
    %v262 = vsinq.f32.pop %v259
    %vm263 = vweird.f32 %v144
    %v264 = vand.u32 %v260, 3
    %vm265 = vcmp.lt.s32.totalorder %v264, 2
    %vm266 = vcmp.eq.s32.totalorder %v264, 0
    %v267 = vxor.u32 %v262, 2147483648
    %v268 = vsel %vm266, %v261, %v267
    %vm269 = vcmp.eq.s32.totalorder %v264, 2
    %v270 = vxor.u32 %v261, 2147483648
    %v271 = vsel %vm269, %v270, %v262
    %v272 = vsel %vm265, %v268, %v271
    %v273 = vsel %vm263, nan, %v272
    %v274 = vand.u32 2147483647, %v145
    %vm275 = vcmp.le.f32.partialorder %v274, 0.7853982
    %vm276 = vcmp.lt.s32.totalorder %v145, 0
    %v277 = vand.u32 %v145, 2139095040
    %v278 = vshrl.u32 %v277, 23
    %v279 = vsub.s32 %v278, 127
    %v280 = vand.u32 2147483647, %v145
    %v281 = vand.u32 %v280, 8388607
    %v282 = vor.u32 %v281, 8388608
    %v283 = vsub.s32 0, %v282
    %v284 = vadd.s32 %v279, 1
    %vm285 = vcmp.gt.s32.totalorder %v284, 0
    %v286 = vsel %vm285, %v284, 0
    %v287 = vshrl.u32 %v286, 5
    %v288 = vand.u32 %v286, 31
    %v289 = vsub.s32 32, %v288
    %v290 = vshrl.u32 683565275, %v289
    %v291 = vshll.u32 683565275, %v288
    %v292 = vshrl.u32 2475754826, %v289
    %v293 = vor.u32 %v291, %v292
    %v294 = vshll.u32 2475754826, %v288
    %v295 = vshrl.u32 2131351028, %v289
    %v296 = vor.u32 %v294, %v295
    %v297 = vshll.u32 2131351028, %v288
    %v298 = vshrl.u32 2102212464, %v289
    %v299 = vor.u32 %v297, %v298
    %v300 = vshll.u32 2102212464, %v288
    %v301 = vshrl.u32 920167782, %v289
    %v302 = vor.u32 %v300, %v301
    %v303 = vshll.u32 920167782, %v288
    %v304 = vshrl.u32 1326507024, %v289
    %v305 = vor.u32 %v303, %v304
    %vm306 = vcmp.lt.s32.totalorder %v287, 1
    %vm307 = vcmp.lt.s32.totalorder %v287, 2
    %vm308 = vcmp.lt.s32.totalorder %v287, 3
    %vm309 = vcmp.lt.s32.totalorder %v287, 4
    %v310 = vsel %vm306, %v290, %v293
    %v311 = vsel %vm309, %v299, 2102212464
    %v312 = vsel %vm308, %v296, %v311
    %v313 = vsel %vm307, %v310, %v312
    %v314 = vsel %vm306, %v293, %v296
    %v315 = vsel %vm309, %v302, 920167782
    %v316 = vsel %vm308, %v299, %v315
    %v317 = vsel %vm307, %v314, %v316
    %v318 = vsel %vm306, %v296, %v299
    %v319 = vsel %vm309, %v305, 1326507024
    %v320 = vsel %vm308, %v302, %v319
    %v321 = vsel %vm307, %v318, %v320
    %v322 = vshll.u32 %v282, 8
    %v323 = vmul.u32.u64.compose %v322, %v321
    %v324 = vextract.low.u32 %v323
    %v325 = vextract.high.u32 %v323
    %v326 = vmul.u32.u64.compose %v322, %v317
    %v327 = vextract.low.u32 %v326
    %v328 = vextract.high.u32 %v326
    %v329 = vmul.u32 %v322, %v313
    %v330 = vadd.s32 %v325, %v327
    %vm331 = vc.u32 %v325, %v327
    %v332 = vadd.s32 %v328, 1
    %v333 = vsel %vm331, %v332, %v328
    %v334 = vadd.s32 %v329, %v333
    %v335 = vadd.s32 %v334, 536870912
    %v336 = vshrl.u32 %v335, 30
    %v337 = vshll.u32 %v336, 30
    %v338 = vsub.s32 %v334, %v337
    %vm339 = vcmp.lt.s32.totalorder %v338, 0
    %v340 = vsub.s32 0, %v338
    %v341 = vsel %vm339, %v340, %v338
    %v342 = vclz %v341
    %v343 = vsub.s32 %v342, 2
    %vm344 = vcmp.gt.s32.totalorder 0, %v343
    %v345 = vsel %vm344, 0, %v343
    %v346 = vsub.s32 32, %v345
    %v347 = vshll.u32 %v338, %v345
    %v348 = vshrl.u32 %v330, %v346
    %v349 = vor.u32 %v347, %v348
    %v350 = vsub.s32 4294967266, %v345
    %v351 = vadd.s32 %v350, 127
    %v352 = vshll.u32 %v351, 23
    %v353 = vor.u32 4788187, %v352
    %v354 = vand.u32 2147483647, %v353
    %v356 = vcvt.s32.f32 %v349
    %v357 = vmul.f32 %v356, %v354
    %v358 = vxor.u32 %v357, 2147483648
    %v359 = vsel %vm276, %v358, %v357
    %v360 = vsub.s32 4, %v336
    %v361 = vsel %vm276, %v360, %v336
    %v362 = vsel %vm275, %v145, %v359
    %v363 = vsel %vm275, 0, %v361
    %v364 = vcosq.f32.pop %v362
    %v365 = vsinq.f32.pop %v362
    %vm366 = vweird.f32 %v145
    %v367 = vand.u32 %v363, 3
    %vm368 = vcmp.lt.s32.totalorder %v367, 2
    %vm369 = vcmp.eq.s32.totalorder %v367, 0
    %v370 = vxor.u32 %v365, 2147483648
    %v371 = vsel %vm369, %v364, %v370
    %vm372 = vcmp.eq.s32.totalorder %v367, 2
    %v373 = vxor.u32 %v364, 2147483648
    %v374 = vsel %vm372, %v373, %v365
    %v375 = vsel %vm368, %v371, %v374
    %v376 = vsel %vm366, nan, %v375
    %v377 = vand.u32 2147483647, %v146
    %vm378 = vcmp.le.f32.partialorder %v377, 0.7853982
    %vm379 = vcmp.lt.s32.totalorder %v146, 0
    %v380 = vand.u32 %v146, 2139095040
    %v381 = vshrl.u32 %v380, 23
    %v382 = vsub.s32 %v381, 127
    %v383 = vand.u32 2147483647, %v146
    %v384 = vand.u32 %v383, 8388607
    %v385 = vor.u32 %v384, 8388608
    %v386 = vsub.s32 0, %v385
    %v387 = vadd.s32 %v382, 1
    %vm388 = vcmp.gt.s32.totalorder %v387, 0
    %v389 = vsel %vm388, %v387, 0
    %v390 = vshrl.u32 %v389, 5
    %v391 = vand.u32 %v389, 31
    %v392 = vsub.s32 32, %v391
    %v393 = vshrl.u32 683565275, %v392
    %v394 = vshll.u32 683565275, %v391
    %v395 = vshrl.u32 2475754826, %v392
    %v396 = vor.u32 %v394, %v395
    %v397 = vshll.u32 2475754826, %v391
    %v398 = vshrl.u32 2131351028, %v392
    %v399 = vor.u32 %v397, %v398
    %v400 = vshll.u32 2131351028, %v391
    %v401 = vshrl.u32 2102212464, %v392
    %v402 = vor.u32 %v400, %v401
    %v403 = vshll.u32 2102212464, %v391
    %v404 = vshrl.u32 920167782, %v392
    %v405 = vor.u32 %v403, %v404
    %v406 = vshll.u32 920167782, %v391
    %v407 = vshrl.u32 1326507024, %v392
    %v408 = vor.u32 %v406, %v407
    %vm409 = vcmp.lt.s32.totalorder %v390, 1
    %vm410 = vcmp.lt.s32.totalorder %v390, 2
    %vm411 = vcmp.lt.s32.totalorder %v390, 3
    %vm412 = vcmp.lt.s32.totalorder %v390, 4
    %v413 = vsel %vm409, %v393, %v396
    %v414 = vsel %vm412, %v402, 2102212464
    %v415 = vsel %vm411, %v399, %v414
    %v416 = vsel %vm410, %v413, %v415
    %v417 = vsel %vm409, %v396, %v399
    %v418 = vsel %vm412, %v405, 920167782
    %v419 = vsel %vm411, %v402, %v418
    %v420 = vsel %vm410, %v417, %v419
    %v421 = vsel %vm409, %v399, %v402
    %v422 = vsel %vm412, %v408, 1326507024
    %v423 = vsel %vm411, %v405, %v422
    %v424 = vsel %vm410, %v421, %v423
    %v425 = vshll.u32 %v385, 8
    %v426 = vmul.u32.u64.compose %v425, %v424
    %v427 = vextract.low.u32 %v426
    %v428 = vextract.high.u32 %v426
    %v429 = vmul.u32.u64.compose %v425, %v420
    %v430 = vextract.low.u32 %v429
    %v431 = vextract.high.u32 %v429
    %v432 = vmul.u32 %v425, %v416
    %v433 = vadd.s32 %v428, %v430
    %vm434 = vc.u32 %v428, %v430
    %v435 = vadd.s32 %v431, 1
    %v436 = vsel %vm434, %v435, %v431
    %v437 = vadd.s32 %v432, %v436
    %v438 = vadd.s32 %v437, 536870912
    %v439 = vshrl.u32 %v438, 30
    %v440 = vshll.u32 %v439, 30
    %v441 = vsub.s32 %v437, %v440
    %vm442 = vcmp.lt.s32.totalorder %v441, 0
    %v443 = vsub.s32 0, %v441
    %v444 = vsel %vm442, %v443, %v441
    %v445 = vclz %v444
    %v446 = vsub.s32 %v445, 2
    %vm447 = vcmp.gt.s32.totalorder 0, %v446
    %v448 = vsel %vm447, 0, %v446
    %v449 = vsub.s32 32, %v448
    %v450 = vshll.u32 %v441, %v448
    %v451 = vshrl.u32 %v433, %v449
    %v452 = vor.u32 %v450, %v451
    %v453 = vsub.s32 4294967266, %v448
    %v454 = vadd.s32 %v453, 127
    %v455 = vshll.u32 %v454, 23
    %v456 = vor.u32 4788187, %v455
    %v457 = vand.u32 2147483647, %v456
    %v459 = vcvt.s32.f32 %v452
    %v460 = vmul.f32 %v459, %v457
    %v461 = vxor.u32 %v460, 2147483648
    %v462 = vsel %vm379, %v461, %v460
    %v463 = vsub.s32 4, %v439
    %v464 = vsel %vm379, %v463, %v439
    %v465 = vsel %vm378, %v146, %v462
    %v466 = vsel %vm378, 0, %v464
    %v467 = vcosq.f32.pop %v465
    %v468 = vsinq.f32.pop %v465
    %vm469 = vweird.f32 %v146
    %v470 = vand.u32 %v466, 3
    %vm471 = vcmp.lt.s32.totalorder %v470, 2
    %vm472 = vcmp.eq.s32.totalorder %v470, 0
    %v473 = vxor.u32 %v468, 2147483648
    %v474 = vsel %vm472, %v467, %v473
    %vm475 = vcmp.eq.s32.totalorder %v470, 2
    %v476 = vxor.u32 %v467, 2147483648
    %v477 = vsel %vm475, %v476, %v468
    %v478 = vsel %vm471, %v474, %v477
    %v479 = vsel %vm469, nan, %v478
    %v480 = vand.u32 2147483647, %v144
    %vm481 = vcmp.le.f32.partialorder %v480, 0.7853982
    %vm482 = vcmp.lt.s32.totalorder %v144, 0
    %v483 = vand.u32 %v144, 2139095040
    %v484 = vshrl.u32 %v483, 23
    %v485 = vsub.s32 %v484, 127
    %v486 = vand.u32 2147483647, %v144
    %v487 = vand.u32 %v486, 8388607
    %v488 = vor.u32 %v487, 8388608
    %v489 = vsub.s32 0, %v488
    %v490 = vadd.s32 %v485, 1
    %vm491 = vcmp.gt.s32.totalorder %v490, 0
    %v492 = vsel %vm491, %v490, 0
    %v493 = vshrl.u32 %v492, 5
    %v494 = vand.u32 %v492, 31
    %v495 = vsub.s32 32, %v494
    %v496 = vshrl.u32 683565275, %v495
    %v497 = vshll.u32 683565275, %v494
    %v498 = vshrl.u32 2475754826, %v495
    %v499 = vor.u32 %v497, %v498
    %v500 = vshll.u32 2475754826, %v494
    %v501 = vshrl.u32 2131351028, %v495
    %v502 = vor.u32 %v500, %v501
    %v503 = vshll.u32 2131351028, %v494
    %v504 = vshrl.u32 2102212464, %v495
    %v505 = vor.u32 %v503, %v504
    %v506 = vshll.u32 2102212464, %v494
    %v507 = vshrl.u32 920167782, %v495
    %v508 = vor.u32 %v506, %v507
    %v509 = vshll.u32 920167782, %v494
    %v510 = vshrl.u32 1326507024, %v495
    %v511 = vor.u32 %v509, %v510
    %vm512 = vcmp.lt.s32.totalorder %v493, 1
    %vm513 = vcmp.lt.s32.totalorder %v493, 2
    %vm514 = vcmp.lt.s32.totalorder %v493, 3
    %vm515 = vcmp.lt.s32.totalorder %v493, 4
    %v516 = vsel %vm512, %v496, %v499
    %v517 = vsel %vm515, %v505, 2102212464
    %v518 = vsel %vm514, %v502, %v517
    %v519 = vsel %vm513, %v516, %v518
    %v520 = vsel %vm512, %v499, %v502
    %v521 = vsel %vm515, %v508, 920167782
    %v522 = vsel %vm514, %v505, %v521
    %v523 = vsel %vm513, %v520, %v522
    %v524 = vsel %vm512, %v502, %v505
    %v525 = vsel %vm515, %v511, 1326507024
    %v526 = vsel %vm514, %v508, %v525
    %v527 = vsel %vm513, %v524, %v526
    %v528 = vshll.u32 %v488, 8
    %v529 = vmul.u32.u64.compose %v528, %v527
    %v530 = vextract.low.u32 %v529
    %v531 = vextract.high.u32 %v529
    %v532 = vmul.u32.u64.compose %v528, %v523
    %v533 = vextract.low.u32 %v532
    %v534 = vextract.high.u32 %v532
    %v535 = vmul.u32 %v528, %v519
    %v536 = vadd.s32 %v531, %v533
    %vm537 = vc.u32 %v531, %v533
    %v538 = vadd.s32 %v534, 1
    %v539 = vsel %vm537, %v538, %v534
    %v540 = vadd.s32 %v535, %v539
    %v541 = vadd.s32 %v540, 536870912
    %v542 = vshrl.u32 %v541, 30
    %v543 = vshll.u32 %v542, 30
    %v544 = vsub.s32 %v540, %v543
    %vm545 = vcmp.lt.s32.totalorder %v544, 0
    %v546 = vsub.s32 0, %v544
    %v547 = vsel %vm545, %v546, %v544
    %v548 = vclz %v547
    %v549 = vsub.s32 %v548, 2
    %vm550 = vcmp.gt.s32.totalorder 0, %v549
    %v551 = vsel %vm550, 0, %v549
    %v552 = vsub.s32 32, %v551
    %v553 = vshll.u32 %v544, %v551
    %v554 = vshrl.u32 %v536, %v552
    %v555 = vor.u32 %v553, %v554
    %v556 = vsub.s32 4294967266, %v551
    %v557 = vadd.s32 %v556, 127
    %v558 = vshll.u32 %v557, 23
    %v559 = vor.u32 4788187, %v558
    %v560 = vand.u32 2147483647, %v559
    %v562 = vcvt.s32.f32 %v555
    %v563 = vmul.f32 %v562, %v560
    %v564 = vxor.u32 %v563, 2147483648
    %v565 = vsel %vm482, %v564, %v563
    %v566 = vsub.s32 4, %v542
    %v567 = vsel %vm482, %v566, %v542
    %v568 = vsel %vm481, %v144, %v565
    %v569 = vsel %vm481, 0, %v567
    %v570 = vcosq.f32.pop %v568
    %v571 = vsinq.f32.pop %v568
    %vm572 = vweird.f32 %v144
    %v573 = vadd.s32 %v569, 3
    %v574 = vand.u32 %v573, 3
    %vm575 = vcmp.lt.s32.totalorder %v574, 2
    %vm576 = vcmp.eq.s32.totalorder %v574, 0
    %v577 = vxor.u32 %v571, 2147483648
    %v578 = vsel %vm576, %v570, %v577
    %vm579 = vcmp.eq.s32.totalorder %v574, 2
    %v580 = vxor.u32 %v570, 2147483648
    %v581 = vsel %vm579, %v580, %v571
    %v582 = vsel %vm575, %v578, %v581
    %v583 = vsel %vm572, nan, %v582
    %v584 = vand.u32 2147483647, %v145
    %vm585 = vcmp.le.f32.partialorder %v584, 0.7853982
    %vm586 = vcmp.lt.s32.totalorder %v145, 0
    %v587 = vand.u32 %v145, 2139095040
    %v588 = vshrl.u32 %v587, 23
    %v589 = vsub.s32 %v588, 127
    %v590 = vand.u32 2147483647, %v145
    %v591 = vand.u32 %v590, 8388607
    %v592 = vor.u32 %v591, 8388608
    %v593 = vsub.s32 0, %v592
    %v594 = vadd.s32 %v589, 1
    %vm595 = vcmp.gt.s32.totalorder %v594, 0
    %v596 = vsel %vm595, %v594, 0
    %v597 = vshrl.u32 %v596, 5
    %v598 = vand.u32 %v596, 31
    %v599 = vsub.s32 32, %v598
    %v600 = vshrl.u32 683565275, %v599
    %v601 = vshll.u32 683565275, %v598
    %v602 = vshrl.u32 2475754826, %v599
    %v603 = vor.u32 %v601, %v602
    %v604 = vshll.u32 2475754826, %v598
    %v605 = vshrl.u32 2131351028, %v599
    %v606 = vor.u32 %v604, %v605
    %v607 = vshll.u32 2131351028, %v598
    %v608 = vshrl.u32 2102212464, %v599
    %v609 = vor.u32 %v607, %v608
    %v610 = vshll.u32 2102212464, %v598
    %v611 = vshrl.u32 920167782, %v599
    %v612 = vor.u32 %v610, %v611
    %v613 = vshll.u32 920167782, %v598
    %v614 = vshrl.u32 1326507024, %v599
    %v615 = vor.u32 %v613, %v614
    %vm616 = vcmp.lt.s32.totalorder %v597, 1
    %vm617 = vcmp.lt.s32.totalorder %v597, 2
    %vm618 = vcmp.lt.s32.totalorder %v597, 3
    %vm619 = vcmp.lt.s32.totalorder %v597, 4
    %v620 = vsel %vm616, %v600, %v603
    %v621 = vsel %vm619, %v609, 2102212464
    %v622 = vsel %vm618, %v606, %v621
    %v623 = vsel %vm617, %v620, %v622
    %v624 = vsel %vm616, %v603, %v606
    %v625 = vsel %vm619, %v612, 920167782
    %v626 = vsel %vm618, %v609, %v625
    %v627 = vsel %vm617, %v624, %v626
    %v628 = vsel %vm616, %v606, %v609
    %v629 = vsel %vm619, %v615, 1326507024
    %v630 = vsel %vm618, %v612, %v629
    %v631 = vsel %vm617, %v628, %v630
    %v632 = vshll.u32 %v592, 8
    %v633 = vmul.u32.u64.compose %v632, %v631
    %v634 = vextract.low.u32 %v633
    %v635 = vextract.high.u32 %v633
    %v636 = vmul.u32.u64.compose %v632, %v627
    %v637 = vextract.low.u32 %v636
    %v638 = vextract.high.u32 %v636
    %v639 = vmul.u32 %v632, %v623
    %v640 = vadd.s32 %v635, %v637
    %vm641 = vc.u32 %v635, %v637
    %v642 = vadd.s32 %v638, 1
    %v643 = vsel %vm641, %v642, %v638
    %v644 = vadd.s32 %v639, %v643
    %v645 = vadd.s32 %v644, 536870912
    %v646 = vshrl.u32 %v645, 30
    %v647 = vshll.u32 %v646, 30
    %v648 = vsub.s32 %v644, %v647
    %vm649 = vcmp.lt.s32.totalorder %v648, 0
    %v650 = vsub.s32 0, %v648
    %v651 = vsel %vm649, %v650, %v648
    %v652 = vclz %v651
    %v653 = vsub.s32 %v652, 2
    %vm654 = vcmp.gt.s32.totalorder 0, %v653
    %v655 = vsel %vm654, 0, %v653
    %v656 = vsub.s32 32, %v655
    %v657 = vshll.u32 %v648, %v655
    %v658 = vshrl.u32 %v640, %v656
    %v659 = vor.u32 %v657, %v658
    %v660 = vsub.s32 4294967266, %v655
    %v661 = vadd.s32 %v660, 127
    %v662 = vshll.u32 %v661, 23
    %v663 = vor.u32 4788187, %v662
    %v664 = vand.u32 2147483647, %v663
    %v666 = vcvt.s32.f32 %v659
    %v667 = vmul.f32 %v666, %v664
    %v668 = vxor.u32 %v667, 2147483648
    %v669 = vsel %vm586, %v668, %v667
    %v670 = vsub.s32 4, %v646
    %v671 = vsel %vm586, %v670, %v646
    %v672 = vsel %vm585, %v145, %v669
    %v673 = vsel %vm585, 0, %v671
    %v674 = vcosq.f32.pop %v672
    %v675 = vsinq.f32.pop %v672
    %vm676 = vweird.f32 %v145
    %v677 = vadd.s32 %v673, 3
    %v678 = vand.u32 %v677, 3
    %vm679 = vcmp.lt.s32.totalorder %v678, 2
    %vm680 = vcmp.eq.s32.totalorder %v678, 0
    %v681 = vxor.u32 %v675, 2147483648
    %v682 = vsel %vm680, %v674, %v681
    %vm683 = vcmp.eq.s32.totalorder %v678, 2
    %v684 = vxor.u32 %v674, 2147483648
    %v685 = vsel %vm683, %v684, %v675
    %v686 = vsel %vm679, %v682, %v685
    %v687 = vsel %vm676, nan, %v686
    %v688 = vand.u32 2147483647, %v146
    %vm689 = vcmp.le.f32.partialorder %v688, 0.7853982
    %vm690 = vcmp.lt.s32.totalorder %v146, 0
    %v691 = vand.u32 %v146, 2139095040
    %v692 = vshrl.u32 %v691, 23
    %v693 = vsub.s32 %v692, 127
    %v694 = vand.u32 2147483647, %v146
    %v695 = vand.u32 %v694, 8388607
    %v696 = vor.u32 %v695, 8388608
    %v697 = vsub.s32 0, %v696
    %v698 = vadd.s32 %v693, 1
    %vm699 = vcmp.gt.s32.totalorder %v698, 0
    %v700 = vsel %vm699, %v698, 0
    %v701 = vshrl.u32 %v700, 5
    %v702 = vand.u32 %v700, 31
    %v703 = vsub.s32 32, %v702
    %v704 = vshrl.u32 683565275, %v703
    %v705 = vshll.u32 683565275, %v702
    %v706 = vshrl.u32 2475754826, %v703
    %v707 = vor.u32 %v705, %v706
    %v708 = vshll.u32 2475754826, %v702
    %v709 = vshrl.u32 2131351028, %v703
    %v710 = vor.u32 %v708, %v709
    %v711 = vshll.u32 2131351028, %v702
    %v712 = vshrl.u32 2102212464, %v703
    %v713 = vor.u32 %v711, %v712
    %v714 = vshll.u32 2102212464, %v702
    %v715 = vshrl.u32 920167782, %v703
    %v716 = vor.u32 %v714, %v715
    %v717 = vshll.u32 920167782, %v702
    %v718 = vshrl.u32 1326507024, %v703
    %v719 = vor.u32 %v717, %v718
    %vm720 = vcmp.lt.s32.totalorder %v701, 1
    %vm721 = vcmp.lt.s32.totalorder %v701, 2
    %vm722 = vcmp.lt.s32.totalorder %v701, 3
    %vm723 = vcmp.lt.s32.totalorder %v701, 4
    %v724 = vsel %vm720, %v704, %v707
    %v725 = vsel %vm723, %v713, 2102212464
    %v726 = vsel %vm722, %v710, %v725
    %v727 = vsel %vm721, %v724, %v726
    %v728 = vsel %vm720, %v707, %v710
    %v729 = vsel %vm723, %v716, 920167782
    %v730 = vsel %vm722, %v713, %v729
    %v731 = vsel %vm721, %v728, %v730
    %v732 = vsel %vm720, %v710, %v713
    %v733 = vsel %vm723, %v719, 1326507024
    %v734 = vsel %vm722, %v716, %v733
    %v735 = vsel %vm721, %v732, %v734
    %v736 = vshll.u32 %v696, 8
    %v737 = vmul.u32.u64.compose %v736, %v735
    %v738 = vextract.low.u32 %v737
    %v739 = vextract.high.u32 %v737
    %v740 = vmul.u32.u64.compose %v736, %v731
    %v741 = vextract.low.u32 %v740
    %v742 = vextract.high.u32 %v740
    %v743 = vmul.u32 %v736, %v727
    %v744 = vadd.s32 %v739, %v741
    %vm745 = vc.u32 %v739, %v741
    %v746 = vadd.s32 %v742, 1
    %v747 = vsel %vm745, %v746, %v742
    %v748 = vadd.s32 %v743, %v747
    %v749 = vadd.s32 %v748, 536870912
    %v750 = vshrl.u32 %v749, 30
    %v751 = vshll.u32 %v750, 30
    %v752 = vsub.s32 %v748, %v751
    %vm753 = vcmp.lt.s32.totalorder %v752, 0
    %v754 = vsub.s32 0, %v752
    %v755 = vsel %vm753, %v754, %v752
    %v756 = vclz %v755
    %v757 = vsub.s32 %v756, 2
    %vm758 = vcmp.gt.s32.totalorder 0, %v757
    %v759 = vsel %vm758, 0, %v757
    %v760 = vsub.s32 32, %v759
    %v761 = vshll.u32 %v752, %v759
    %v762 = vshrl.u32 %v744, %v760
    %v763 = vor.u32 %v761, %v762
    %v764 = vsub.s32 4294967266, %v759
    %v765 = vadd.s32 %v764, 127
    %v766 = vshll.u32 %v765, 23
    %v767 = vor.u32 4788187, %v766
    %v768 = vand.u32 2147483647, %v767
    %v770 = vcvt.s32.f32 %v763
    %v771 = vmul.f32 %v770, %v768
    %v772 = vxor.u32 %v771, 2147483648
    %v773 = vsel %vm690, %v772, %v771
    %v774 = vsub.s32 4, %v750
    %v775 = vsel %vm690, %v774, %v750
    %v776 = vsel %vm689, %v146, %v773
    %v777 = vsel %vm689, 0, %v775
    %v778 = vcosq.f32.pop %v776
    %v779 = vsinq.f32.pop %v776
    %vm780 = vweird.f32 %v146
    %v781 = vadd.s32 %v777, 3
    %v782 = vand.u32 %v781, 3
    %vm783 = vcmp.lt.s32.totalorder %v782, 2
    %vm784 = vcmp.eq.s32.totalorder %v782, 0
    %v785 = vxor.u32 %v779, 2147483648
    %v786 = vsel %vm784, %v778, %v785
    %vm787 = vcmp.eq.s32.totalorder %v782, 2
    %v788 = vxor.u32 %v778, 2147483648
    %v789 = vsel %vm787, %v788, %v779
    %v790 = vsel %vm783, %v786, %v789
    %v791 = vsel %vm780, nan, %v790
    %v792 = vsub.f32 1.0, %v273
    %v793 = vsub.f32 1.0, %v376
    %v794 = vsub.f32 1.0, %v479
    %v795 = vmul.f32 %v147, %v147
    %v796 = vmul.f32 %v148, %v148
    %v797 = vmul.f32 %v149, %v149
    %v798 = vmul.f32 %v795, %v792
    %v799 = vmul.f32 %v796, %v793
    %v800 = vmul.f32 %v797, %v794
    %v801 = vadd.f32 %v273, %v798
    %v802 = vadd.f32 %v376, %v799
    %v803 = vadd.f32 %v479, %v800
    %v807 = vrot.slane %v159, 1
    %v808 = vrot.slane %v160, 1
    %v809 = vrot.slane %v161, 1
    %v813 = vmul.f32 %v147, %v807
    %v814 = vmul.f32 %v148, %v808
    %v815 = vmul.f32 %v149, %v809
    %v816 = vmul.f32 %v813, %v792
    %v817 = vmul.f32 %v814, %v793
    %v818 = vmul.f32 %v815, %v794
    %v822 = vrot.slane %v583, 6
    %v823 = vrot.slane %v687, 6
    %v824 = vrot.slane %v791, 6
    %v828 = vmul.f32 %v168, %v822
    %v829 = vmul.f32 %v169, %v823
    %v830 = vmul.f32 %v170, %v824
    %v834 = vrot.slane %v828, 2
    %v835 = vrot.slane %v829, 2
    %v836 = vrot.slane %v830, 2
    %v840 = vsub.f32 %v816, %v834
    %v841 = vsub.f32 %v817, %v835
    %v842 = vsub.f32 %v818, %v836
    %v846 = vrot.slane %v168, 2
    %v847 = vrot.slane %v169, 2
    %v848 = vrot.slane %v170, 2
    %v852 = vmul.f32 %v147, %v846
    %v853 = vmul.f32 %v148, %v847
    %v854 = vmul.f32 %v149, %v848
    %v855 = vmul.f32 %v852, %v792
    %v856 = vmul.f32 %v853, %v793
    %v857 = vmul.f32 %v854, %v794
    %v858 = vrot.slane %v583, 7
    %v859 = vrot.slane %v687, 7
    %v860 = vrot.slane %v791, 7
    %v864 = vmul.f32 %v159, %v858
    %v865 = vmul.f32 %v160, %v859
    %v866 = vmul.f32 %v161, %v860
    %v870 = vrot.slane %v864, 1
    %v871 = vrot.slane %v865, 1
    %v872 = vrot.slane %v866, 1
    %v876 = vadd.f32 %v855, %v870
    %v877 = vadd.f32 %v856, %v871
    %v878 = vadd.f32 %v857, %v872
    %v879 = vadd.f32 %v816, %v834
    %v880 = vadd.f32 %v817, %v835
    %v881 = vadd.f32 %v818, %v836
    %v882 = vmul.f32 %v159, %v159
    %v883 = vmul.f32 %v160, %v160
    %v884 = vmul.f32 %v161, %v161
    %v888 = vrot.slane %v792, 7
    %v889 = vrot.slane %v793, 7
    %v890 = vrot.slane %v794, 7
    %v894 = vmul.f32 %v882, %v888
    %v895 = vmul.f32 %v883, %v889
    %v896 = vmul.f32 %v884, %v890
    %v900 = vrot.slane %v894, 1
    %v901 = vrot.slane %v895, 1
    %v902 = vrot.slane %v896, 1
    %v906 = vadd.f32 %v273, %v900
    %v907 = vadd.f32 %v376, %v901
    %v908 = vadd.f32 %v479, %v902
    %v909 = vrot.slane %v168, 1
    %v910 = vrot.slane %v169, 1
    %v911 = vrot.slane %v170, 1
    %v915 = vmul.f32 %v159, %v909
    %v916 = vmul.f32 %v160, %v910
    %v917 = vmul.f32 %v161, %v911
    %v918 = vmul.f32 %v915, %v888
    %v919 = vmul.f32 %v916, %v889
    %v920 = vmul.f32 %v917, %v890
    %v921 = vmul.f32 %v147, %v583
    %v922 = vmul.f32 %v148, %v687
    %v923 = vmul.f32 %v149, %v791
    %v927 = vrot.slane %v921, 7
    %v928 = vrot.slane %v922, 7
    %v929 = vrot.slane %v923, 7
    %v933 = vsub.f32 %v918, %v927
    %v934 = vsub.f32 %v919, %v928
    %v935 = vsub.f32 %v920, %v929
    %v936 = vsub.f32 %v855, %v870
    %v937 = vsub.f32 %v856, %v871
    %v938 = vsub.f32 %v857, %v872
    %v939 = vadd.f32 %v918, %v927
    %v940 = vadd.f32 %v919, %v928
    %v941 = vadd.f32 %v920, %v929
    %v942 = vmul.f32 %v168, %v168
    %v943 = vmul.f32 %v169, %v169
    %v944 = vmul.f32 %v170, %v170
    %v945 = vrot.slane %v792, 6
    %v946 = vrot.slane %v793, 6
    %v947 = vrot.slane %v794, 6
    %v951 = vmul.f32 %v942, %v945
    %v952 = vmul.f32 %v943, %v946
    %v953 = vmul.f32 %v944, %v947
    %v957 = vrot.slane %v951, 2
    %v958 = vrot.slane %v952, 2
    %v959 = vrot.slane %v953, 2
    %v963 = vadd.f32 %v273, %v957
    %v964 = vadd.f32 %v376, %v958
    %v965 = vadd.f32 %v479, %v959
    %v969 = vrot.slane %v801, 4
    %v970 = vrot.slane %v802, 4
    %v971 = vrot.slane %v803, 4
    %v975 = vsub.f32 %v801, %v969
    %v976 = vsub.f32 %v802, %v970
    %v977 = vsub.f32 %v803, %v971
    %v978 = vand.u32 2147483647, %v975
    %v979 = vand.u32 2147483647, %v976
    %v980 = vand.u32 2147483647, %v977
    %v984 = vrot.slane %v840, 4
    %v985 = vrot.slane %v841, 4
    %v986 = vrot.slane %v842, 4
    %v990 = vsub.f32 %v840, %v984
    %v991 = vsub.f32 %v841, %v985
    %v992 = vsub.f32 %v842, %v986
    %v993 = vand.u32 2147483647, %v990
    %v994 = vand.u32 2147483647, %v991
    %v995 = vand.u32 2147483647, %v992
    %v996 = vadd.f32 %v978, %v993
    %v997 = vadd.f32 %v979, %v994
    %v998 = vadd.f32 %v980, %v995
    %v1002 = vrot.slane %v876, 4
    %v1003 = vrot.slane %v877, 4
    %v1004 = vrot.slane %v878, 4
    %v1008 = vsub.f32 %v876, %v1002
    %v1009 = vsub.f32 %v877, %v1003
    %v1010 = vsub.f32 %v878, %v1004
    %v1011 = vand.u32 2147483647, %v1008
    %v1012 = vand.u32 2147483647, %v1009
    %v1013 = vand.u32 2147483647, %v1010
    %v1014 = vadd.f32 %v996, %v1011
    %v1015 = vadd.f32 %v997, %v1012
    %v1016 = vadd.f32 %v998, %v1013
    %v1020 = vrot.slane %v879, 4
    %v1021 = vrot.slane %v880, 4
    %v1022 = vrot.slane %v881, 4
    %v1026 = vsub.f32 %v879, %v1020
    %v1027 = vsub.f32 %v880, %v1021
    %v1028 = vsub.f32 %v881, %v1022
    %v1029 = vand.u32 2147483647, %v1026
    %v1030 = vand.u32 2147483647, %v1027
    %v1031 = vand.u32 2147483647, %v1028
    %v1032 = vadd.f32 %v1014, %v1029
    %v1033 = vadd.f32 %v1015, %v1030
    %v1034 = vadd.f32 %v1016, %v1031
    %v1038 = vrot.slane %v906, 4
    %v1039 = vrot.slane %v907, 4
    %v1040 = vrot.slane %v908, 4
    %v1044 = vsub.f32 %v906, %v1038
    %v1045 = vsub.f32 %v907, %v1039
    %v1046 = vsub.f32 %v908, %v1040
    %v1047 = vand.u32 2147483647, %v1044
    %v1048 = vand.u32 2147483647, %v1045
    %v1049 = vand.u32 2147483647, %v1046
    %v1050 = vadd.f32 %v1032, %v1047
    %v1051 = vadd.f32 %v1033, %v1048
    %v1052 = vadd.f32 %v1034, %v1049
    %v1056 = vrot.slane %v933, 4
    %v1057 = vrot.slane %v934, 4
    %v1058 = vrot.slane %v935, 4
    %v1062 = vsub.f32 %v933, %v1056
    %v1063 = vsub.f32 %v934, %v1057
    %v1064 = vsub.f32 %v935, %v1058
    %v1065 = vand.u32 2147483647, %v1062
    %v1066 = vand.u32 2147483647, %v1063
    %v1067 = vand.u32 2147483647, %v1064
    %v1071 = vrot.slane %v1065, 1
    %v1072 = vrot.slane %v1066, 1
    %v1073 = vrot.slane %v1067, 1
    %v1077 = vadd.f32 %v1050, %v1071
    %v1078 = vadd.f32 %v1051, %v1072
    %v1079 = vadd.f32 %v1052, %v1073
    %v1083 = vrot.slane %v936, 4
    %v1084 = vrot.slane %v937, 4
    %v1085 = vrot.slane %v938, 4
    %v1089 = vsub.f32 %v936, %v1083
    %v1090 = vsub.f32 %v937, %v1084
    %v1091 = vsub.f32 %v938, %v1085
    %v1092 = vand.u32 2147483647, %v1089
    %v1093 = vand.u32 2147483647, %v1090
    %v1094 = vand.u32 2147483647, %v1091
    %v1095 = vadd.f32 %v1077, %v1092
    %v1096 = vadd.f32 %v1078, %v1093
    %v1097 = vadd.f32 %v1079, %v1094
    %v1101 = vrot.slane %v939, 4
    %v1102 = vrot.slane %v940, 4
    %v1103 = vrot.slane %v941, 4
    %v1107 = vsub.f32 %v939, %v1101
    %v1108 = vsub.f32 %v940, %v1102
    %v1109 = vsub.f32 %v941, %v1103
    %v1110 = vand.u32 2147483647, %v1107
    %v1111 = vand.u32 2147483647, %v1108
    %v1112 = vand.u32 2147483647, %v1109
    %v1116 = vrot.slane %v1110, 1
    %v1117 = vrot.slane %v1111, 1
    %v1118 = vrot.slane %v1112, 1
    %v1122 = vadd.f32 %v1095, %v1116
    %v1123 = vadd.f32 %v1096, %v1117
    %v1124 = vadd.f32 %v1097, %v1118
    %v1128 = vrot.slane %v963, 4
    %v1129 = vrot.slane %v964, 4
    %v1130 = vrot.slane %v965, 4
    %v1134 = vsub.f32 %v963, %v1128
    %v1135 = vsub.f32 %v964, %v1129
    %v1136 = vsub.f32 %v965, %v1130
    %v1137 = vand.u32 2147483647, %v1134
    %v1138 = vand.u32 2147483647, %v1135
    %v1139 = vand.u32 2147483647, %v1136
    %v1140 = vadd.f32 %v1122, %v1137
    %v1141 = vadd.f32 %v1123, %v1138
    %v1142 = vadd.f32 %v1124, %v1139
    %v1143 = vsel %vm57, %v1140, 0.0
    %v1144 = vsel %vm57, %v1141, 0.0
    %v1145 = vadd.f32 %v1143, %v1144
    %v1146 = vsel %vm57, %v1142, 0.0
    %v1147 = vadd.f32 %v1145, %v1146
    %1148 = vadd.xlane.f32.xlu0 %v1147
    %v1149 = vpop.xlane.xlu0 %1148
    %v1150 = vrot.slane %v1149, 4
    %v1151 = vadd.f32 %v1149, %v1150
    %v1152 = vrot.slane %v1151, 2
    %v1153 = vadd.f32 %v1151, %v1152
    %v1154 = vrot.slane %v1153, 1
    %v1155 = vadd.f32 %v1153, %v1154
    %s1156 = vtos %v1155
    %s1157 = scalar_lea.smem [#allocation2], 2
    %1158 = sst [smem:[%s1157]] %s1156
    %v1159 = vld [vmem:[%s2] sm:$0xff]
    %v1160 = vld [vmem:[%s2 + $0x8] sm:$0xff]
    %v1161 = vld [vmem:[%s2 + $0x10] sm:$0xff]
    %v1162 = vld [vmem:[%s2 + $0x18] sm:$0xff]
    %v1163 = vld [vmem:[%s3] sm:$0xff]
    %v1164 = vld [vmem:[%s3 + $0x8] sm:$0xff]
    %v1165 = vsub.f32 %v1159, %v1163
    %v1166 = vsub.f32 %v1161, %v1164
    %v1167 = vand.u32 2147483647, %v1165
    %v1168 = vand.u32 2147483647, %v1166
    %v1169 = vadd.f32 %v1167, %v1168
    %v1170 = vrot.slane %v1169, 4
    %v1171 = vadd.f32 %v1169, %v1170
    %v1172 = vrot.slane %v1171, 2
    %v1173 = vadd.f32 %v1171, %v1172
    %v1174 = vrot.slane %v1173, 1
    %v1175 = vadd.f32 %v1173, %v1174
    %v1176 = vlaneseq
    %v1177 = vand.u32 %v1176, 127
    %vm1178 = vcmp.ge.s32.totalorder %v1177, 75
    %v1179 = vsel %vm1178, 1, 0
    %v1180 = vcvt.s32.f32 %v1179
    %v1181 = vmul.f32 %v1175, %v1180
    %v1182 = vsel %vm57, %v1181, 0.0
    %1183 = vadd.xlane.f32.xlu0 %v1182
    %v1184 = vpop.xlane.xlu0 %1183
    %v1185 = vrot.slane %v1184, 4
    %v1186 = vadd.f32 %v1184, %v1185
    %v1187 = vrot.slane %v1186, 2
    %v1188 = vadd.f32 %v1186, %v1187
    %v1189 = vrot.slane %v1188, 1
    %v1190 = vadd.f32 %v1188, %v1189
    %s1191 = vtos %v1190
    %s1192 = scalar_lea.smem [#allocation2], 3
    %1193 = sst [smem:[%s1192]] %s1191
    %vm1194 = vcmp.lt.s32.totalorder %v1177, 3
    %v1195 = vsel %vm1194, 1, 0
    %v1196 = vcvt.s32.f32 %v1195
    %v1197 = vmul.f32 %v1175, %v1196
    %v1198 = vsel %vm57, %v1197, 0.0
    %1199 = vadd.xlane.f32.xlu0 %v1198
    %v1200 = vpop.xlane.xlu0 %1199
    %v1201 = vrot.slane %v1200, 4
    %v1202 = vadd.f32 %v1200, %v1201
    %v1203 = vrot.slane %v1202, 2
    %v1204 = vadd.f32 %v1202, %v1203
    %v1205 = vrot.slane %v1204, 1
    %v1206 = vadd.f32 %v1204, %v1205
    %s1207 = vtos %v1206
    %s1208 = scalar_lea.smem [#allocation2], 4
    %1209 = sst [smem:[%s1208]] %s1207
    %v1210 = vlaneseq
    %v1211 = vshrl.u32 %v1210, 7
    %v1212 = vadd.s32 %v1211, 8
    %vm1213 = vcmp.lt.s32.totalorder %v1211, 15
    %vm1214 = vcmp.lt.s32.totalorder %v1212, 15
    %vm1215 = vcmp.ne.s32.totalorder %v1211, 7
    %vm1216 = vcmp.ne.s32.totalorder %v1212, 7
    %vm1217 = vmand %vm1213, %vm1215
    %vm1218 = vmand %vm1214, %vm1216
    %vm1219 = vcmp.ne.s32.totalorder %v1211, 15
    %vm1220 = vcmp.ne.s32.totalorder %v1212, 15
    %vm1221 = vmand %vm1217, %vm1219
    %vm1222 = vmand %vm1218, %vm1220
    %v1227 = vrot.slane %v1159, 7
    %v1228 = vrot.slane %v1160, 7
    %v1229 = vrot.slane %v1161, 7
    %v1230 = vsel %vm57, %v1227, %v1229
    %v1231 = vrot.slane %v1162, 7
    %v1232 = vsel %vm57, %v1228, %v1231
    %v1237 = vsub.f32 %v1159, %v1227
    %v1238 = vsub.f32 %v1160, %v1228
    %v1239 = vsub.f32 %v1161, %v1230
    %v1240 = vsub.f32 %v1162, %v1232
    %v1241 = vand.u32 2147483647, %v1237
    %v1242 = vand.u32 2147483647, %v1238
    %v1243 = vand.u32 2147483647, %v1239
    %v1244 = vand.u32 2147483647, %v1240
    %v1245 = vsel %vm1221, 1, 0
    %v1246 = vsel %vm1222, 1, 0
    %v1247 = vcvt.s32.f32 %v1245
    %v1248 = vcvt.s32.f32 %v1246
    %v1251 = vrot.slane %v1247, 7
    %v1252 = vrot.slane %v1248, 7
    %v1253 = vsel %vm57, %v1251, %v1252
    %v1256 = vmul.f32 %v1241, %v1251
    %v1257 = vmul.f32 %v1242, %v1251
    %v1258 = vmul.f32 %v1243, %v1253
    %v1259 = vmul.f32 %v1244, %v1253
    %vm1264 = vcmask 1046528
    %v1265 = vrot.slane %v1256, 1
    %v1266 = vrot.slane %v1258, 1
    %v1267 = vsel %vm1264, %v1265, %v1266
    %v1268 = vrot.slane %v1257, 1
    %v1269 = vrot.slane %v1259, 1
    %v1270 = vsel %vm1264, %v1268, %v1269
    %v1275 = vsel %vm1264, %v1266, 0.0
    %v1276 = vadd.f32 %v1267, %v1275
    %v1277 = vrot.slane %v1276, 4
    %v1278 = vadd.f32 %v1276, %v1277
    %v1279 = vrot.slane %v1278, 2
    %v1280 = vadd.f32 %v1278, %v1279
    %v1281 = vrot.slane %v1280, 1
    %v1282 = vadd.f32 %v1280, %v1281
    %v1283 = vsel %vm1264, %v1269, 0.0
    %v1284 = vadd.f32 %v1270, %v1283
    %v1285 = vrot.slane %v1284, 4
    %v1286 = vadd.f32 %v1284, %v1285
    %v1287 = vrot.slane %v1286, 2
    %v1288 = vadd.f32 %v1286, %v1287
    %v1289 = vrot.slane %v1288, 1
    %v1290 = vadd.f32 %v1288, %v1289
    %v1291 = vadd.s32 %v1177, 128
    %vm1292 = vcmp.ge.s32.totalorder %v1177, 128
    %vm1293 = vcmp.ge.s32.totalorder %v1291, 128
    %v1294 = vsel %vm1292, 1, 0
    %v1295 = vsel %vm1293, 1, 0
    %v1296 = vcvt.s32.f32 %v1294
    %v1297 = vcvt.s32.f32 %v1295
    %v1298 = vmul.f32 %v1282, %v1296
    %v1299 = vmul.f32 %v1290, %v1297
    %v1300 = vsel %vm57, %v1298, 0.0
    %v1301 = vsel %vm57, %v1299, 0.0
    %v1302 = vadd.f32 %v1300, %v1301
    %1303 = vadd.xlane.f32.xlu0 %v1302
    %v1304 = vpop.xlane.xlu0 %1303
    %v1305 = vrot.slane %v1304, 4
    %v1306 = vadd.f32 %v1304, %v1305
    %v1307 = vrot.slane %v1306, 2
    %v1308 = vadd.f32 %v1306, %v1307
    %v1309 = vrot.slane %v1308, 1
    %v1310 = vadd.f32 %v1308, %v1309
    %s1311 = vtos %v1310
    %s1312 = scalar_lea.smem [#allocation2], 5
    %1313 = sst [smem:[%s1312]] %s1311
    %vm1314 = vcmp.ge.s32.totalorder %v1177, 3
    %vm1315 = vcmp.ge.s32.totalorder %v1291, 3
    %vm1316 = vcmp.lt.s32.totalorder %v1177, 75
    %vm1317 = vcmp.lt.s32.totalorder %v1291, 75
    %vm1318 = vmand %vm1314, %vm1316
    %vm1319 = vmand %vm1315, %vm1317
    %v1320 = vsel %vm1318, 1, 0
    %v1321 = vsel %vm1319, 1, 0
    %v1322 = vcvt.s32.f32 %v1320
    %v1323 = vcvt.s32.f32 %v1321
    %v1324 = vmul.f32 %v1282, %v1322
    %v1325 = vmul.f32 %v1290, %v1323
    %v1326 = vsel %vm57, %v1324, 0.0
    %v1327 = vsel %vm57, %v1325, 0.0
    %v1328 = vadd.f32 %v1326, %v1327
    %1329 = vadd.xlane.f32.xlu0 %v1328
    %v1330 = vpop.xlane.xlu0 %1329
    %v1331 = vrot.slane %v1330, 4
    %v1332 = vadd.f32 %v1330, %v1331
    %v1333 = vrot.slane %v1332, 2
    %v1334 = vadd.f32 %v1332, %v1333
    %v1335 = vrot.slane %v1334, 1
    %v1336 = vadd.f32 %v1334, %v1335
    %s1337 = vtos %v1336
    %s1338 = scalar_lea.smem [#allocation2], 6
    %1339 = sst [smem:[%s1338]] %s1337
    %vm1340 = vcmp.ge.s32.totalorder %v1291, 75
    %vm1341 = vcmp.lt.s32.totalorder %v1177, 128
    %vm1342 = vcmp.lt.s32.totalorder %v1291, 128
    %vm1343 = vmand %vm1178, %vm1341
    %vm1344 = vmand %vm1340, %vm1342
    %v1345 = vsel %vm1343, 1, 0
    %v1346 = vsel %vm1344, 1, 0
    %v1347 = vcvt.s32.f32 %v1345
    %v1348 = vcvt.s32.f32 %v1346
    %v1349 = vmul.f32 %v1282, %v1347
    %v1350 = vmul.f32 %v1290, %v1348
    %v1351 = vsel %vm57, %v1349, 0.0
    %v1352 = vsel %vm57, %v1350, 0.0
    %v1353 = vadd.f32 %v1351, %v1352
    %1354 = vadd.xlane.f32.xlu0 %v1353
    %v1355 = vpop.xlane.xlu0 %1354
    %v1356 = vrot.slane %v1355, 4
    %v1357 = vadd.f32 %v1355, %v1356
    %v1358 = vrot.slane %v1357, 2
    %v1359 = vadd.f32 %v1357, %v1358
    %v1360 = vrot.slane %v1359, 1
    %v1361 = vadd.f32 %v1359, %v1360
    %s1362 = vtos %v1361
    %s1363 = scalar_lea.smem [#allocation2], 7
    %1364 = sst [smem:[%s1363]] %s1362
    %vm1365 = vcmp.lt.s32.totalorder %v1291, 3
    %v1366 = vsel %vm1365, 1, 0
    %v1367 = vcvt.s32.f32 %v1366
    %v1368 = vmul.f32 %v1282, %v1196
    %v1369 = vmul.f32 %v1290, %v1367
    %v1370 = vsel %vm57, %v1368, 0.0
    %v1371 = vsel %vm57, %v1369, 0.0
    %v1372 = vadd.f32 %v1370, %v1371
    %1373 = vadd.xlane.f32.xlu0 %v1372
    %v1374 = vpop.xlane.xlu0 %1373
    %v1375 = vrot.slane %v1374, 4
    %v1376 = vadd.f32 %v1374, %v1375
    %v1377 = vrot.slane %v1376, 2
    %v1378 = vadd.f32 %v1376, %v1377
    %v1379 = vrot.slane %v1378, 1
    %v1380 = vadd.f32 %v1378, %v1379
    %s1381 = vtos %v1380
    %s1382 = scalar_lea.smem [#allocation2], 8
    %1383 = sst [smem:[%s1382]] %s1381
    // Predicated region
    $region18: #{_hpspi_forward.1} parent=1 // pred_check
      _
    $region19: #{_hpspi_forward.1} parent=1 // pred_check_branch
      %1385 = sbr.rel (0) target = $region21
    $region20: #{_hpspi_forward.1} parent=1 // pred_region
      %s1387 = ssub.s32 16, 16
      %1388 = vsyncadd [#allocation3], %s1387
      %s1390 = sshll.u32 %s4, 4
      %s1391 = int_to_ptr.vmem [resolvable:$true] %s1390
      %1393 = dma.smem_to_vmem [#allocation2], 16, %s1391, [#allocation3]
    $region21: #{_hpspi_forward.1} parent=1 // pred_fallthru
      _
    // Predicated region
    $region22: #{_hpspi_forward.1} parent=1 // pred_check
      _
    $region23: #{_hpspi_forward.1} parent=1 // pred_check_branch
      %1395 = sbr.rel (0) target = $region25
    $region24: #{_hpspi_forward.1} parent=1 // pred_region
      %1396 = dma.done [#allocation3], 16
    $region25: #{_hpspi_forward.1} parent=1 // pred_fallthru
      _
    %1397 = sfence
    %1398 = vsyncpa [#allocation3], 1

</llo_original>
